<compile_context>
chip_gen: v5e
topology: v5e:2x2
jax: 0.10.0
libtpu: 0.0.40
codegen_flags: <defaults>
</compile_context>

<pallas_src>
import functools

import jax
import jax.numpy as jnp
from jax.experimental import pallas as pl
from jax.experimental.pallas import tpu as pltpu

D_IN, D_H1, D_H2, D_OUT = 300, 1024, 256, 10
D_IN_PAD = 384      # 3 * 128 lanes (300 would be padded internally anyway)
D_OUT_PAD = 128     # lane-dense output slab, sliced to 10 in the wrapper
BN_EPS = 1e-5
NEG_BIG = -1e30     # bias for padded output columns: exp() underflows to 0


def net_kernel(x_ref, w1_ref, b1_ref, w2_ref, b2_ref, w3_ref, b3_ref, o_ref):
    # BatchNorms are folded into the Linear weights/biases at wrapper time
    # (eval-mode running stats). Dropout(p=0.2) is identity in eval mode.
    # TODO(synk): training-mode stochastic dropout / batch-stat BN not implemented.
    x = x_ref[...]                                            # (TN, 384) f32

    # Linear(300,1024) with BN1 (pre) and BN2 (post) folded in.
    h = jnp.dot(x.astype(jnp.bfloat16), w1_ref[...],
                preferred_element_type=jnp.float32) + b1_ref[...]
    h = jnp.maximum(h, 0.0)                                   # ReLU (f32 VPU)

    # Linear(1024,256) with BN3 (post) folded in.
    h = jnp.dot(h.astype(jnp.bfloat16), w2_ref[...],
                preferred_element_type=jnp.float32) + b2_ref[...]
    h = jnp.maximum(h, 0.0)                                   # ReLU

    # Linear(256,10) padded to 128 output lanes (padded lanes get -1e30 bias).
    logits = jnp.dot(h.astype(jnp.bfloat16), w3_ref[...],
                     preferred_element_type=jnp.float32) + b3_ref[...]

    # Softmax over the feature axis; padded lanes contribute exactly 0.
    m = jnp.max(logits, axis=1, keepdims=True)
    e = jnp.exp(logits - m)
    o_ref[...] = e / jnp.sum(e, axis=1, keepdims=True)


def _round_up(n, m):
    return (n + m - 1) // m * m


def make_params(key):
    """Parameter init mirroring the PyTorch module (xavier_normal, relu gain)."""
    ks = jax.random.split(key, 6)
    gain = jnp.sqrt(2.0)  # nn.init.calculate_gain('relu')

    def xavier_normal(k, fan_in, fan_out):
        std = gain * jnp.sqrt(2.0 / (fan_in + fan_out))
        # stored as (in, out) so the kernel does x @ W  (== x @ W_pt.T)
        return std * jax.random.normal(k, (fan_in, fan_out), jnp.float32)

    def bias(k, fan_in, fan_out):
        bound = 1.0 / jnp.sqrt(fan_in)
        return jax.random.uniform(k, (fan_out,), jnp.float32, -bound, bound)

    def bn(num_features):
        # PyTorch defaults: gamma=1, beta=0, running_mean=0, running_var=1
        return dict(gamma=jnp.ones((num_features,), jnp.float32),
                    beta=jnp.zeros((num_features,), jnp.float32),
                    mean=jnp.zeros((num_features,), jnp.float32),
                    var=jnp.ones((num_features,), jnp.float32))

    return dict(
        bn1=bn(D_IN), bn2=bn(D_H1), bn3=bn(D_H2),
        w1=xavier_normal(ks[0], D_IN, D_H1), b1=bias(ks[1], D_IN, D_H1),
        w2=xavier_normal(ks[2], D_H1, D_H2), b2=bias(ks[3], D_H1, D_H2),
        w3=xavier_normal(ks[4], D_H2, D_OUT), b3=bias(ks[5], D_OUT, D_OUT) * 0
             + bias(ks[5], D_H2, D_OUT),
    )


def fold_and_pack(params):
    """Fold BN1/BN2/BN3 into the Linears (f32), pad, cast weights to bf16."""
    def bn_ss(bn):
        s = bn["gamma"] / jnp.sqrt(bn["var"] + BN_EPS)
        return s, bn["beta"] - bn["mean"] * s

    s1, t1 = bn_ss(params["bn1"])
    s2, t2 = bn_ss(params["bn2"])
    s3, t3 = bn_ss(params["bn3"])

    # BN1 (pre) folded as row-scaling of W1 + shift pushed through W1;
    # BN2 (post) folded as column-scaling of W1 and bias update.
    w1 = params["w1"] * s1[:, None]
    b1 = params["b1"] + t1 @ params["w1"]
    w1 = w1 * s2[None, :]
    b1 = b1 * s2 + t2

    # BN3 (post) folded into Linear2.
    w2 = params["w2"] * s3[None, :]
    b2 = params["b2"] * s3 + t3

    w3, b3 = params["w3"], params["b3"]

    # Pad input-feature axis 300 -> 384 (zero rows contribute nothing).
    w1 = jnp.pad(w1, ((0, D_IN_PAD - D_IN), (0, 0)))
    # Pad output axis 10 -> 128; padded columns get a huge negative bias so the
    # softmax over 128 lanes equals the softmax over the real 10 logits.
    w3 = jnp.pad(w3, ((0, 0), (0, D_OUT_PAD - D_OUT)))
    b3 = jnp.concatenate(
        [b3, jnp.full((D_OUT_PAD - D_OUT,), NEG_BIG, jnp.float32)])

    return (w1.astype(jnp.bfloat16), b1.reshape(1, -1).astype(jnp.float32),
            w2.astype(jnp.bfloat16), b2.reshape(1, -1).astype(jnp.float32),
            w3.astype(jnp.bfloat16), b3.reshape(1, -1).astype(jnp.float32))


def net_forward(x, params):
    N = x.shape[0]
    w1, b1, w2, b2, w3, b3 = fold_and_pack(params)

    # Batch tile: multiple of 8 sublanes, capped at 256 rows (~1.5 MB f32 acts).
    tile_n = min(256, _round_up(max(N, 1), 8))
    n_pad = _round_up(N, tile_n)
    x_pad = jnp.pad(x.astype(jnp.float32),
                    ((0, n_pad - N), (0, D_IN_PAD - D_IN)))

    def resident_spec(shape):  # weights/biases stay VMEM-resident across tiles
        return pl.BlockSpec(shape, lambda i, _shape=shape: (0,) * len(_shape))

    out = pl.pallas_call(
        net_kernel,
        out_shape=jax.ShapeDtypeStruct((n_pad, D_OUT_PAD), jnp.float32),
        grid_spec=pltpu.PrefetchScalarGridSpec(
            num_scalar_prefetch=0,
            grid=(n_pad // tile_n,),
            in_specs=[
                pl.BlockSpec((tile_n, D_IN_PAD), lambda i: (i, 0)),
                resident_spec(w1.shape), resident_spec(b1.shape),
                resident_spec(w2.shape), resident_spec(b2.shape),
                resident_spec(w3.shape), resident_spec(b3.shape),
            ],
            out_specs=pl.BlockSpec((tile_n, D_OUT_PAD), lambda i: (i, 0)),
        ),
        compiler_params=pltpu.CompilerParams(
            dimension_semantics=("parallel",),   # shards batch tiles on v7x 2-TC
            vmem_limit_bytes=32 << 20,           # fits v7x's 64 MiB physical VMEM
        ),
    )(x_pad, w1, b1, w2, b2, w3, b3)

    return out[:N, :D_OUT]


if __name__ == "__main__":
    key = jax.random.PRNGKey(0)
    k_x, k_p = jax.random.split(key)
    N = 8
    x = jax.random.normal(k_x, (N, D_IN), jnp.float32)
    params = make_params(k_p)

    out = net_forward(x, params)
    out = jax.block_until_ready(out)

    assert out.shape == (N, D_OUT)
    assert bool(jnp.all(jnp.isfinite(out)))
    # softmax rows sum to 1
    assert bool(jnp.allclose(jnp.sum(out, axis=1), 1.0, atol=1e-5))
    print("KERNEL_OK")
</pallas_src>

<mosaic_0001>
module attributes {stable_mosaic.version = 11 : i64} {
  func.func @net_kernel(%arg0: i32, %arg1: memref<8x384xf32, #tpu.memory_space<vmem>>, %arg2: memref<384x1024xbf16, #tpu.memory_space<vmem>>, %arg3: memref<1x1024xf32, #tpu.memory_space<vmem>>, %arg4: memref<1024x256xbf16, #tpu.memory_space<vmem>>, %arg5: memref<1x256xf32, #tpu.memory_space<vmem>>, %arg6: memref<256x128xbf16, #tpu.memory_space<vmem>>, %arg7: memref<1x128xf32, #tpu.memory_space<vmem>>, %arg8: memref<8x128xf32, #tpu.memory_space<vmem>>) attributes {dimension_semantics = [#tpu.dimension_semantics<parallel>], iteration_bounds = array<i64: 1>, scalar_prefetch = 0 : i64, scratch_operands = 0 : i64, tpu.core_type = #tpu.core_type<tc>, window_params = [{transform_indices = @transform_0, window_bounds = array<i64: 8, 384>}, {pipeline_mode = #tpu.pipeline_mode<synchronous>, transform_indices = @transform_1, window_bounds = array<i64: 384, 1024>}, {pipeline_mode = #tpu.pipeline_mode<synchronous>, transform_indices = @transform_2, window_bounds = array<i64: 1, 1024>}, {pipeline_mode = #tpu.pipeline_mode<synchronous>, transform_indices = @transform_3, window_bounds = array<i64: 1024, 256>}, {pipeline_mode = #tpu.pipeline_mode<synchronous>, transform_indices = @transform_4, window_bounds = array<i64: 1, 256>}, {pipeline_mode = #tpu.pipeline_mode<synchronous>, transform_indices = @transform_5, window_bounds = array<i64: 256, 128>}, {pipeline_mode = #tpu.pipeline_mode<synchronous>, transform_indices = @transform_6, window_bounds = array<i64: 1, 128>}, {transform_indices = @transform_7, window_bounds = array<i64: 8, 128>}]} {
    %c0 = arith.constant 0 : index
    %c0_0 = arith.constant 0 : index
    %0 = vector.load %arg1[%c0, %c0_0] : memref<8x384xf32, #tpu.memory_space<vmem>>, vector<8x384xf32>
    %1 = arith.truncf %0 : vector<8x384xf32> to vector<8x384xbf16>
    %c0_1 = arith.constant 0 : index
    %c0_2 = arith.constant 0 : index
    %2 = vector.load %arg2[%c0_1, %c0_2] : memref<384x1024xbf16, #tpu.memory_space<vmem>>, vector<384x1024xbf16>
    %cst = arith.constant dense<0.000000e+00> : vector<8x1024xf32>
    %3 = tpu.matmul %1, %2, %cst {dimension_numbers = #tpu.dot_dimension_numbers<[1], [0], [0], [1], [0, 0, 1, 1], [], []>} : vector<8x384xbf16>, vector<384x1024xbf16>, vector<8x1024xf32> -> vector<8x1024xf32>
    %c0_3 = arith.constant 0 : index
    %c0_4 = arith.constant 0 : index
    %4 = vector.load %arg3[%c0_3, %c0_4] : memref<1x1024xf32, #tpu.memory_space<vmem>>, vector<1x1024xf32>
    %5 = vector.broadcast %4 : vector<1x1024xf32> to vector<8x1024xf32>
    %6 = arith.addf %3, %5 : vector<8x1024xf32>
    %cst_5 = arith.constant 0.000000e+00 : f32
    %7 = vector.broadcast %cst_5 : f32 to vector<8x1024xf32>
    %8 = arith.maximumf %6, %7 : vector<8x1024xf32>
    %9 = arith.truncf %8 : vector<8x1024xf32> to vector<8x1024xbf16>
    %c0_6 = arith.constant 0 : index
    %c0_7 = arith.constant 0 : index
    %10 = vector.load %arg4[%c0_6, %c0_7] : memref<1024x256xbf16, #tpu.memory_space<vmem>>, vector<1024x256xbf16>
    %cst_8 = arith.constant dense<0.000000e+00> : vector<8x256xf32>
    %11 = tpu.matmul %9, %10, %cst_8 {dimension_numbers = #tpu.dot_dimension_numbers<[1], [0], [0], [1], [0, 0, 1, 1], [], []>} : vector<8x1024xbf16>, vector<1024x256xbf16>, vector<8x256xf32> -> vector<8x256xf32>
    %c0_9 = arith.constant 0 : index
    %c0_10 = arith.constant 0 : index
    %12 = vector.load %arg5[%c0_9, %c0_10] : memref<1x256xf32, #tpu.memory_space<vmem>>, vector<1x256xf32>
    %13 = vector.broadcast %12 : vector<1x256xf32> to vector<8x256xf32>
    %14 = arith.addf %11, %13 : vector<8x256xf32>
    %cst_11 = arith.constant 0.000000e+00 : f32
    %15 = vector.broadcast %cst_11 : f32 to vector<8x256xf32>
    %16 = arith.maximumf %14, %15 : vector<8x256xf32>
    %17 = arith.truncf %16 : vector<8x256xf32> to vector<8x256xbf16>
    %c0_12 = arith.constant 0 : index
    %c0_13 = arith.constant 0 : index
    %18 = vector.load %arg6[%c0_12, %c0_13] : memref<256x128xbf16, #tpu.memory_space<vmem>>, vector<256x128xbf16>
    %cst_14 = arith.constant dense<0.000000e+00> : vector<8x128xf32>
    %19 = tpu.matmul %17, %18, %cst_14 {dimension_numbers = #tpu.dot_dimension_numbers<[1], [0], [0], [1], [0, 0, 1, 1], [], []>} : vector<8x256xbf16>, vector<256x128xbf16>, vector<8x128xf32> -> vector<8x128xf32>
    %c0_15 = arith.constant 0 : index
    %c0_16 = arith.constant 0 : index
    %20 = vector.load %arg7[%c0_15, %c0_16] : memref<1x128xf32, #tpu.memory_space<vmem>>, vector<1x128xf32>
    %21 = vector.broadcast %20 : vector<1x128xf32> to vector<8x128xf32>
    %22 = arith.addf %19, %21 : vector<8x128xf32>
    %cst_17 = arith.constant dense<0xFF800000> : vector<8xf32>
    %23 = vector.multi_reduction <maximumf>, %22, %cst_17 [1] : vector<8x128xf32> to vector<8xf32>
    %24 = vector.shape_cast %23 : vector<8xf32> to vector<8x1xf32>
    %25 = vector.broadcast %24 : vector<8x1xf32> to vector<8x128xf32>
    %26 = arith.subf %22, %25 : vector<8x128xf32>
    %27 = math.exp %26 : vector<8x128xf32>
    %cst_18 = arith.constant dense<0.000000e+00> : vector<8xf32>
    %28 = vector.multi_reduction <add>, %27, %cst_18 [1] : vector<8x128xf32> to vector<8xf32>
    %29 = vector.shape_cast %28 : vector<8xf32> to vector<8x1xf32>
    %30 = vector.broadcast %29 : vector<8x1xf32> to vector<8x128xf32>
    %31 = arith.divf %27, %30 : vector<8x128xf32>
    %c0_19 = arith.constant 0 : index
    %c0_20 = arith.constant 0 : index
    %32 = vector.load %arg8[%c0_19, %c0_20] : memref<8x128xf32, #tpu.memory_space<vmem>>, vector<8x128xf32>
    tpu.vector_store %arg8[%c0_19, %c0_20], %31 {strides = array<i32>} : memref<8x128xf32, #tpu.memory_space<vmem>>, vector<8x128xf32>,
    return
  }
  func.func @transform_0(%arg0: i32) -> (i32, i32) {
    %c0_i32 = arith.constant 0 : i32
    %c0_i32_0 = arith.constant 0 : i32
    return %arg0, %c0_i32 : i32, i32
  }
  func.func @transform_1(%arg0: i32) -> (i32, i32) {
    %c0_i32 = arith.constant 0 : i32
    %c0_i32_0 = arith.constant 0 : i32
    %c0_i32_1 = arith.constant 0 : i32
    return %c0_i32, %c0_i32_0 : i32, i32
  }
  func.func @transform_2(%arg0: i32) -> (i32, i32) {
    %c0_i32 = arith.constant 0 : i32
    %c0_i32_0 = arith.constant 0 : i32
    %c0_i32_1 = arith.constant 0 : i32
    return %c0_i32, %c0_i32_0 : i32, i32
  }
  func.func @transform_3(%arg0: i32) -> (i32, i32) {
    %c0_i32 = arith.constant 0 : i32
    %c0_i32_0 = arith.constant 0 : i32
    %c0_i32_1 = arith.constant 0 : i32
    return %c0_i32, %c0_i32_0 : i32, i32
  }
  func.func @transform_4(%arg0: i32) -> (i32, i32) {
    %c0_i32 = arith.constant 0 : i32
    %c0_i32_0 = arith.constant 0 : i32
    %c0_i32_1 = arith.constant 0 : i32
    return %c0_i32, %c0_i32_0 : i32, i32
  }
  func.func @transform_5(%arg0: i32) -> (i32, i32) {
    %c0_i32 = arith.constant 0 : i32
    %c0_i32_0 = arith.constant 0 : i32
    %c0_i32_1 = arith.constant 0 : i32
    return %c0_i32, %c0_i32_0 : i32, i32
  }
  func.func @transform_6(%arg0: i32) -> (i32, i32) {
    %c0_i32 = arith.constant 0 : i32
    %c0_i32_0 = arith.constant 0 : i32
    %c0_i32_1 = arith.constant 0 : i32
    return %c0_i32, %c0_i32_0 : i32, i32
  }
  func.func @transform_7(%arg0: i32) -> (i32, i32) {
    %c0_i32 = arith.constant 0 : i32
    %c0_i32_0 = arith.constant 0 : i32
    return %arg0, %c0_i32 : i32, i32
  }
}

</mosaic_0001>

<llo_original>
// kernel: tpu_custom_call.1
$region0: #{tpu_custom_call.1}
  #allocation0 [shape = 'u32[]', space=smem, size = 0x4, offset = 0x4, fixed_abs, tag = 'smem constant byte address 0x4 - core index']
  #allocation1 [shape = 'u32[72,128]{1,0:T(1,128)}', space=vmem, size = 0x9000, scoped, tag = 'internal scratch']
  %s0 = inlined_call_operand.hbm [shape: f32[8,384], index: 0, kind: input, shape index: {}]
  %s1 = inlined_call_operand.hbm [shape: bf16[384,1024], index: 1, kind: input, shape index: {}]
  %s2 = inlined_call_operand.hbm [shape: f32[1,1024], index: 2, kind: input, shape index: {}]
  %s3 = inlined_call_operand.hbm [shape: bf16[1024,256], index: 3, kind: input, shape index: {}]
  %s4 = inlined_call_operand.vmem [shape: f32[1,256], index: 4, kind: input, shape index: {}]
  %s5 = inlined_call_operand.hbm [shape: bf16[256,128], index: 5, kind: input, shape index: {}]
  %s6 = inlined_call_operand.vmem [shape: f32[1,128], index: 6, kind: input, shape index: {}]
  %s7 = inlined_call_operand.hbm [shape: f32[8,128], index: 7, kind: output, shape index: {}]
  %s8 = sld [smem:[#allocation0]]
  $region58: #{tpu_custom_call.1} parent=0
    _
  %s10 = ssub.s32 1, %s8
  %s11 = scalar_select 0, %s10, %s8
  $region1: #{tpu_custom_call.1} parent=0
    #allocation2 [shape = 'u8[12288]{0}', space=vmem, size = 0x3000, scoped, tag = 'input window, operand 0, single buffered']
    #allocation3 [shape = 's32[1]{0}', space=sflag, size = 0x4, scoped, tag = 'scoped memory for tpu_custom_call.1']
    #allocation4 [shape = 's32[1]{0}', space=sflag, size = 0x4, scoped, tag = 'scoped memory for tpu_custom_call.1']
    #allocation5 [shape = 'u8[786432]{0}', space=vmem, size = 0xc0000, scoped, tag = 'input window, operand 1, single buffered']
    #allocation6 [shape = 's32[1]{0}', space=sflag, size = 0x4, scoped, tag = 'scoped memory for tpu_custom_call.1']
    #allocation7 [shape = 'u8[4096]{0}', space=vmem, size = 0x1000, scoped, tag = 'input window, operand 2, single buffered']
    #allocation8 [shape = 'u8[524288]{0}', space=vmem, size = 0x80000, scoped, tag = 'input window, operand 3, single buffered']
    #allocation9 [shape = 's32[1]{0}', space=sflag, size = 0x4, scoped, tag = 'scoped memory for tpu_custom_call.1']
    #allocation10 [shape = 'u8[65536]{0}', space=vmem, size = 0x10000, scoped, tag = 'input window, operand 5, single buffered']
    #allocation11 [shape = 'u8[4096]{0}', space=vmem, size = 0x1000, scoped, tag = 'output window, operand 0, single buffered']
    %12 = vsyncpa [#allocation3], 0
    %13 = vsyncpa [#allocation6], 0
    %14 = vsyncpa [#allocation9], 0
    %15 = vsyncpa [#allocation4], 0
    // Predicated region
    $region2: #{tpu_custom_call.1} parent=1 // pred_check
      _
    $region3: #{tpu_custom_call.1} parent=1 // pred_check_branch
      %17 = sbr.rel (0) target = $region5
    $region4: #{tpu_custom_call.1} parent=1 // pred_region
      %19 = vsyncadd [#allocation3], 0
      %s21 = sshll.u32 %s0, 4
      %s22 = int_to_ptr.hbm [resolvable:$true] %s21
      %s23 = sshll.u32 [#allocation2], 4
      %s24 = int_to_ptr.vmem [resolvable:$true] %s23
      %26 = dma.hbm_to_vmem [thread:$0]  %s22, 384, %s24, [#allocation3]
    $region5: #{tpu_custom_call.1} parent=1 // pred_fallthru
      _
    // Predicated region
    $region6: #{tpu_custom_call.1} parent=1 // pred_check
      _
    $region7: #{tpu_custom_call.1} parent=1 // pred_check_branch
      %28 = sbr.rel (0) target = $region9
    $region8: #{tpu_custom_call.1} parent=1 // pred_region
      %30 = vsyncadd [#allocation6], 0
      %s31 = sshll.u32 %s1, 4
      %s32 = int_to_ptr.hbm [resolvable:$true] %s31
      %s33 = sshll.u32 [#allocation5], 4
      %s34 = int_to_ptr.vmem [resolvable:$true] %s33
      %39 = dma.hbm_to_vmem [thread:$0]  %s32, 24576, %s34, [#allocation6], 512, 512, 32
    $region9: #{tpu_custom_call.1} parent=1 // pred_fallthru
      _
    // Predicated region
    $region10: #{tpu_custom_call.1} parent=1 // pred_check
      _
    $region11: #{tpu_custom_call.1} parent=1 // pred_check_branch
      %41 = sbr.rel (0) target = $region13
    $region12: #{tpu_custom_call.1} parent=1 // pred_region
      %43 = vsyncadd [#allocation6], 0
      %s45 = sshll.u32 %s2, 4
      %s46 = int_to_ptr.hbm [resolvable:$true] %s45
      %s47 = sshll.u32 [#allocation7], 4
      %s48 = int_to_ptr.vmem [resolvable:$true] %s47
      %50 = dma.hbm_to_vmem [thread:$0]  %s46, 128, %s48, [#allocation6]
    $region13: #{tpu_custom_call.1} parent=1 // pred_fallthru
      _
    // Predicated region
    $region14: #{tpu_custom_call.1} parent=1 // pred_check
      _
    $region15: #{tpu_custom_call.1} parent=1 // pred_check_branch
      %52 = sbr.rel (0) target = $region17
    $region16: #{tpu_custom_call.1} parent=1 // pred_region
      %54 = vsyncadd [#allocation9], 0
      %s55 = sshll.u32 %s3, 4
      %s56 = int_to_ptr.hbm [resolvable:$true] %s55
      %s57 = sshll.u32 [#allocation8], 4
      %s58 = int_to_ptr.vmem [resolvable:$true] %s57
      %63 = dma.hbm_to_vmem [thread:$0]  %s56, 16384, %s58, [#allocation9], 128, 128, 8
    $region17: #{tpu_custom_call.1} parent=1 // pred_fallthru
      _
    // Predicated region
    $region18: #{tpu_custom_call.1} parent=1 // pred_check
      _
    $region19: #{tpu_custom_call.1} parent=1 // pred_check_branch
      %65 = sbr.rel (0) target = $region21
    $region20: #{tpu_custom_call.1} parent=1 // pred_region
      _
    $region21: #{tpu_custom_call.1} parent=1 // pred_fallthru
      _
    // Predicated region
    $region22: #{tpu_custom_call.1} parent=1 // pred_check
      _
    $region23: #{tpu_custom_call.1} parent=1 // pred_check_branch
      %67 = sbr.rel (0) target = $region25
    $region24: #{tpu_custom_call.1} parent=1 // pred_region
      %69 = vsyncadd [#allocation9], 0
      %s70 = sshll.u32 %s5, 4
      %s71 = int_to_ptr.hbm [resolvable:$true] %s70
      %s72 = sshll.u32 [#allocation10], 4
      %s73 = int_to_ptr.vmem [resolvable:$true] %s72
      %78 = dma.hbm_to_vmem [thread:$0]  %s71, 2048, %s73, [#allocation9], 64, 64, 4
    $region25: #{tpu_custom_call.1} parent=1 // pred_fallthru
      _
    // Predicated region
    $region26: #{tpu_custom_call.1} parent=1 // pred_check
      _
    $region27: #{tpu_custom_call.1} parent=1 // pred_check_branch
      %80 = sbr.rel (0) target = $region29
    $region28: #{tpu_custom_call.1} parent=1 // pred_region
      _
    $region29: #{tpu_custom_call.1} parent=1 // pred_fallthru
      _
    // Predicated region
    $region30: #{tpu_custom_call.1} parent=1 // pred_check
      _
    $region31: #{tpu_custom_call.1} parent=1 // pred_check_branch
      %82 = sbr.rel (0) target = $region33
    $region32: #{tpu_custom_call.1} parent=1 // pred_region
      %84 = dma.done [#allocation3], 384
    $region33: #{tpu_custom_call.1} parent=1 // pred_fallthru
      _
    // Predicated region
    $region34: #{tpu_custom_call.1} parent=1 // pred_check
      _
    $region35: #{tpu_custom_call.1} parent=1 // pred_check_branch
      %86 = sbr.rel (0) target = $region37
    $region36: #{tpu_custom_call.1} parent=1 // pred_region
      %88 = dma.done [#allocation6], 24576
    $region37: #{tpu_custom_call.1} parent=1 // pred_fallthru
      _
    // Predicated region
    $region38: #{tpu_custom_call.1} parent=1 // pred_check
      _
    $region39: #{tpu_custom_call.1} parent=1 // pred_check_branch
      %90 = sbr.rel (0) target = $region41
    $region40: #{tpu_custom_call.1} parent=1 // pred_region
      %92 = dma.done [#allocation6], 128
    $region41: #{tpu_custom_call.1} parent=1 // pred_fallthru
      _
    // Predicated region
    $region42: #{tpu_custom_call.1} parent=1 // pred_check
      _
    $region43: #{tpu_custom_call.1} parent=1 // pred_check_branch
      %94 = sbr.rel (0) target = $region45
    $region44: #{tpu_custom_call.1} parent=1 // pred_region
      %96 = dma.done [#allocation9], 16384
    $region45: #{tpu_custom_call.1} parent=1 // pred_fallthru
      _
    // Predicated region
    $region46: #{tpu_custom_call.1} parent=1 // pred_check
      _
    $region47: #{tpu_custom_call.1} parent=1 // pred_check_branch
      %98 = sbr.rel (0) target = $region49
    $region48: #{tpu_custom_call.1} parent=1 // pred_region
      %100 = dma.done [#allocation9], 2048
    $region49: #{tpu_custom_call.1} parent=1 // pred_fallthru
      _
    %v101 = vld [vmem:[#allocation2] sm:$0xff]
    %v102 = vld [vmem:[#allocation2 + $0x8] sm:$0xff]
    %v103 = vld [vmem:[#allocation2 + $0x10] sm:$0xff]
    %v104 = vpack.c.bf16 %v101, %v101
    %v105 = vpack.c.bf16 %v102, %v102
    %v106 = vpack.c.bf16 %v103, %v103
    %v107 = vld [vmem:[#allocation5] sm:$0xff]
    %v108 = vld [vmem:[#allocation5 + $0x8] sm:$0xff]
    %v109 = vld [vmem:[#allocation5 + $0x10] sm:$0xff]
    %v110 = vld [vmem:[#allocation5 + $0x18] sm:$0xff]
    %v111 = vld [vmem:[#allocation5 + $0x20] sm:$0xff]
    %v112 = vld [vmem:[#allocation5 + $0x28] sm:$0xff]
    %v113 = vld [vmem:[#allocation5 + $0x30] sm:$0xff]
    %v114 = vld [vmem:[#allocation5 + $0x38] sm:$0xff]
    %v115 = vld [vmem:[#allocation5 + $0x40] sm:$0xff]
    %v116 = vld [vmem:[#allocation5 + $0x48] sm:$0xff]
    %v117 = vld [vmem:[#allocation5 + $0x50] sm:$0xff]
    %v118 = vld [vmem:[#allocation5 + $0x58] sm:$0xff]
    %v119 = vld [vmem:[#allocation5 + $0x60] sm:$0xff]
    %v120 = vld [vmem:[#allocation5 + $0x68] sm:$0xff]
    %v121 = vld [vmem:[#allocation5 + $0x70] sm:$0xff]
    %v122 = vld [vmem:[#allocation5 + $0x78] sm:$0xff]
    %v123 = vld [vmem:[#allocation5 + $0x80] sm:$0xff]
    %v124 = vld [vmem:[#allocation5 + $0x88] sm:$0xff]
    %v125 = vld [vmem:[#allocation5 + $0x90] sm:$0xff]
    %v126 = vld [vmem:[#allocation5 + $0x98] sm:$0xff]
    %v127 = vld [vmem:[#allocation5 + $0xa0] sm:$0xff]
    %v128 = vld [vmem:[#allocation5 + $0xa8] sm:$0xff]
    %v129 = vld [vmem:[#allocation5 + $0xb0] sm:$0xff]
    %v130 = vld [vmem:[#allocation5 + $0xb8] sm:$0xff]
    %v131 = vld [vmem:[#allocation5 + $0xc0] sm:$0xff]
    %v132 = vld [vmem:[#allocation5 + $0xc8] sm:$0xff]
    %v133 = vld [vmem:[#allocation5 + $0xd0] sm:$0xff]
    %v134 = vld [vmem:[#allocation5 + $0xd8] sm:$0xff]
    %v135 = vld [vmem:[#allocation5 + $0xe0] sm:$0xff]
    %v136 = vld [vmem:[#allocation5 + $0xe8] sm:$0xff]
    %v137 = vld [vmem:[#allocation5 + $0xf0] sm:$0xff]
    %v138 = vld [vmem:[#allocation5 + $0xf8] sm:$0xff]
    %v139 = vld [vmem:[#allocation5 + $0x100] sm:$0xff]
    %v140 = vld [vmem:[#allocation5 + $0x108] sm:$0xff]
    %v141 = vld [vmem:[#allocation5 + $0x110] sm:$0xff]
    %v142 = vld [vmem:[#allocation5 + $0x118] sm:$0xff]
    %v143 = vld [vmem:[#allocation5 + $0x120] sm:$0xff]
    %v144 = vld [vmem:[#allocation5 + $0x128] sm:$0xff]
    %v145 = vld [vmem:[#allocation5 + $0x130] sm:$0xff]
    %v146 = vld [vmem:[#allocation5 + $0x138] sm:$0xff]
    %v147 = vld [vmem:[#allocation5 + $0x140] sm:$0xff]
    %v148 = vld [vmem:[#allocation5 + $0x148] sm:$0xff]
    %v149 = vld [vmem:[#allocation5 + $0x150] sm:$0xff]
    %v150 = vld [vmem:[#allocation5 + $0x158] sm:$0xff]
    %v151 = vld [vmem:[#allocation5 + $0x160] sm:$0xff]
    %v152 = vld [vmem:[#allocation5 + $0x168] sm:$0xff]
    %v153 = vld [vmem:[#allocation5 + $0x170] sm:$0xff]
    %v154 = vld [vmem:[#allocation5 + $0x178] sm:$0xff]
    %v155 = vld [vmem:[#allocation5 + $0x180] sm:$0xff]
    %v156 = vld [vmem:[#allocation5 + $0x188] sm:$0xff]
    %v157 = vld [vmem:[#allocation5 + $0x190] sm:$0xff]
    %v158 = vld [vmem:[#allocation5 + $0x198] sm:$0xff]
    %v159 = vld [vmem:[#allocation5 + $0x1a0] sm:$0xff]
    %v160 = vld [vmem:[#allocation5 + $0x1a8] sm:$0xff]
    %v161 = vld [vmem:[#allocation5 + $0x1b0] sm:$0xff]
    %v162 = vld [vmem:[#allocation5 + $0x1b8] sm:$0xff]
    %v163 = vld [vmem:[#allocation5 + $0x1c0] sm:$0xff]
    %v164 = vld [vmem:[#allocation5 + $0x1c8] sm:$0xff]
    %v165 = vld [vmem:[#allocation5 + $0x1d0] sm:$0xff]
    %v166 = vld [vmem:[#allocation5 + $0x1d8] sm:$0xff]
    %v167 = vld [vmem:[#allocation5 + $0x1e0] sm:$0xff]
    %v168 = vld [vmem:[#allocation5 + $0x1e8] sm:$0xff]
    %v169 = vld [vmem:[#allocation5 + $0x1f0] sm:$0xff]
    %v170 = vld [vmem:[#allocation5 + $0x1f8] sm:$0xff]
    %v171 = vld [vmem:[#allocation5 + $0x200] sm:$0xff]
    %v172 = vld [vmem:[#allocation5 + $0x208] sm:$0xff]
    %v173 = vld [vmem:[#allocation5 + $0x210] sm:$0xff]
    %v174 = vld [vmem:[#allocation5 + $0x218] sm:$0xff]
    %v175 = vld [vmem:[#allocation5 + $0x220] sm:$0xff]
    %v176 = vld [vmem:[#allocation5 + $0x228] sm:$0xff]
    %v177 = vld [vmem:[#allocation5 + $0x230] sm:$0xff]
    %v178 = vld [vmem:[#allocation5 + $0x238] sm:$0xff]
    %v179 = vld [vmem:[#allocation5 + $0x240] sm:$0xff]
    %v180 = vld [vmem:[#allocation5 + $0x248] sm:$0xff]
    %v181 = vld [vmem:[#allocation5 + $0x250] sm:$0xff]
    %v182 = vld [vmem:[#allocation5 + $0x258] sm:$0xff]
    %v183 = vld [vmem:[#allocation5 + $0x260] sm:$0xff]
    %v184 = vld [vmem:[#allocation5 + $0x268] sm:$0xff]
    %v185 = vld [vmem:[#allocation5 + $0x270] sm:$0xff]
    %v186 = vld [vmem:[#allocation5 + $0x278] sm:$0xff]
    %v187 = vld [vmem:[#allocation5 + $0x280] sm:$0xff]
    %v188 = vld [vmem:[#allocation5 + $0x288] sm:$0xff]
    %v189 = vld [vmem:[#allocation5 + $0x290] sm:$0xff]
    %v190 = vld [vmem:[#allocation5 + $0x298] sm:$0xff]
    %v191 = vld [vmem:[#allocation5 + $0x2a0] sm:$0xff]
    %v192 = vld [vmem:[#allocation5 + $0x2a8] sm:$0xff]
    %v193 = vld [vmem:[#allocation5 + $0x2b0] sm:$0xff]
    %v194 = vld [vmem:[#allocation5 + $0x2b8] sm:$0xff]
    %v195 = vld [vmem:[#allocation5 + $0x2c0] sm:$0xff]
    %v196 = vld [vmem:[#allocation5 + $0x2c8] sm:$0xff]
    %v197 = vld [vmem:[#allocation5 + $0x2d0] sm:$0xff]
    %v198 = vld [vmem:[#allocation5 + $0x2d8] sm:$0xff]
    %v199 = vld [vmem:[#allocation5 + $0x2e0] sm:$0xff]
    %v200 = vld [vmem:[#allocation5 + $0x2e8] sm:$0xff]
    %v201 = vld [vmem:[#allocation5 + $0x2f0] sm:$0xff]
    %v202 = vld [vmem:[#allocation5 + $0x2f8] sm:$0xff]
    %v203 = vld [vmem:[#allocation5 + $0x300] sm:$0xff]
    %v204 = vld [vmem:[#allocation5 + $0x308] sm:$0xff]
    %v205 = vld [vmem:[#allocation5 + $0x310] sm:$0xff]
    %v206 = vld [vmem:[#allocation5 + $0x318] sm:$0xff]
    %v207 = vld [vmem:[#allocation5 + $0x320] sm:$0xff]
    %v208 = vld [vmem:[#allocation5 + $0x328] sm:$0xff]
    %v209 = vld [vmem:[#allocation5 + $0x330] sm:$0xff]
    %v210 = vld [vmem:[#allocation5 + $0x338] sm:$0xff]
    %v211 = vld [vmem:[#allocation5 + $0x340] sm:$0xff]
    %v212 = vld [vmem:[#allocation5 + $0x348] sm:$0xff]
    %v213 = vld [vmem:[#allocation5 + $0x350] sm:$0xff]
    %v214 = vld [vmem:[#allocation5 + $0x358] sm:$0xff]
    %v215 = vld [vmem:[#allocation5 + $0x360] sm:$0xff]
    %v216 = vld [vmem:[#allocation5 + $0x368] sm:$0xff]
    %v217 = vld [vmem:[#allocation5 + $0x370] sm:$0xff]
    %v218 = vld [vmem:[#allocation5 + $0x378] sm:$0xff]
    %v219 = vld [vmem:[#allocation5 + $0x380] sm:$0xff]
    %v220 = vld [vmem:[#allocation5 + $0x388] sm:$0xff]
    %v221 = vld [vmem:[#allocation5 + $0x390] sm:$0xff]
    %v222 = vld [vmem:[#allocation5 + $0x398] sm:$0xff]
    %v223 = vld [vmem:[#allocation5 + $0x3a0] sm:$0xff]
    %v224 = vld [vmem:[#allocation5 + $0x3a8] sm:$0xff]
    %v225 = vld [vmem:[#allocation5 + $0x3b0] sm:$0xff]
    %v226 = vld [vmem:[#allocation5 + $0x3b8] sm:$0xff]
    %v227 = vld [vmem:[#allocation5 + $0x3c0] sm:$0xff]
    %v228 = vld [vmem:[#allocation5 + $0x3c8] sm:$0xff]
    %v229 = vld [vmem:[#allocation5 + $0x3d0] sm:$0xff]
    %v230 = vld [vmem:[#allocation5 + $0x3d8] sm:$0xff]
    %v231 = vld [vmem:[#allocation5 + $0x3e0] sm:$0xff]
    %v232 = vld [vmem:[#allocation5 + $0x3e8] sm:$0xff]
    %v233 = vld [vmem:[#allocation5 + $0x3f0] sm:$0xff]
    %v234 = vld [vmem:[#allocation5 + $0x3f8] sm:$0xff]
    %v235 = vld [vmem:[#allocation5 + $0x400] sm:$0xff]
    %v236 = vld [vmem:[#allocation5 + $0x408] sm:$0xff]
    %v237 = vld [vmem:[#allocation5 + $0x410] sm:$0xff]
    %v238 = vld [vmem:[#allocation5 + $0x418] sm:$0xff]
    %v239 = vld [vmem:[#allocation5 + $0x420] sm:$0xff]
    %v240 = vld [vmem:[#allocation5 + $0x428] sm:$0xff]
    %v241 = vld [vmem:[#allocation5 + $0x430] sm:$0xff]
    %v242 = vld [vmem:[#allocation5 + $0x438] sm:$0xff]
    %v243 = vld [vmem:[#allocation5 + $0x440] sm:$0xff]
    %v244 = vld [vmem:[#allocation5 + $0x448] sm:$0xff]
    %v245 = vld [vmem:[#allocation5 + $0x450] sm:$0xff]
    %v246 = vld [vmem:[#allocation5 + $0x458] sm:$0xff]
    %v247 = vld [vmem:[#allocation5 + $0x460] sm:$0xff]
    %v248 = vld [vmem:[#allocation5 + $0x468] sm:$0xff]
    %v249 = vld [vmem:[#allocation5 + $0x470] sm:$0xff]
    %v250 = vld [vmem:[#allocation5 + $0x478] sm:$0xff]
    %v251 = vld [vmem:[#allocation5 + $0x480] sm:$0xff]
    %v252 = vld [vmem:[#allocation5 + $0x488] sm:$0xff]
    %v253 = vld [vmem:[#allocation5 + $0x490] sm:$0xff]
    %v254 = vld [vmem:[#allocation5 + $0x498] sm:$0xff]
    %v255 = vld [vmem:[#allocation5 + $0x4a0] sm:$0xff]
    %v256 = vld [vmem:[#allocation5 + $0x4a8] sm:$0xff]
    %v257 = vld [vmem:[#allocation5 + $0x4b0] sm:$0xff]
    %v258 = vld [vmem:[#allocation5 + $0x4b8] sm:$0xff]
    %v259 = vld [vmem:[#allocation5 + $0x4c0] sm:$0xff]
    %v260 = vld [vmem:[#allocation5 + $0x4c8] sm:$0xff]
    %v261 = vld [vmem:[#allocation5 + $0x4d0] sm:$0xff]
    %v262 = vld [vmem:[#allocation5 + $0x4d8] sm:$0xff]
    %v263 = vld [vmem:[#allocation5 + $0x4e0] sm:$0xff]
    %v264 = vld [vmem:[#allocation5 + $0x4e8] sm:$0xff]
    %v265 = vld [vmem:[#allocation5 + $0x4f0] sm:$0xff]
    %v266 = vld [vmem:[#allocation5 + $0x4f8] sm:$0xff]
    %v267 = vld [vmem:[#allocation5 + $0x500] sm:$0xff]
    %v268 = vld [vmem:[#allocation5 + $0x508] sm:$0xff]
    %v269 = vld [vmem:[#allocation5 + $0x510] sm:$0xff]
    %v270 = vld [vmem:[#allocation5 + $0x518] sm:$0xff]
    %v271 = vld [vmem:[#allocation5 + $0x520] sm:$0xff]
    %v272 = vld [vmem:[#allocation5 + $0x528] sm:$0xff]
    %v273 = vld [vmem:[#allocation5 + $0x530] sm:$0xff]
    %v274 = vld [vmem:[#allocation5 + $0x538] sm:$0xff]
    %v275 = vld [vmem:[#allocation5 + $0x540] sm:$0xff]
    %v276 = vld [vmem:[#allocation5 + $0x548] sm:$0xff]
    %v277 = vld [vmem:[#allocation5 + $0x550] sm:$0xff]
    %v278 = vld [vmem:[#allocation5 + $0x558] sm:$0xff]
    %v279 = vld [vmem:[#allocation5 + $0x560] sm:$0xff]
    %v280 = vld [vmem:[#allocation5 + $0x568] sm:$0xff]
    %v281 = vld [vmem:[#allocation5 + $0x570] sm:$0xff]
    %v282 = vld [vmem:[#allocation5 + $0x578] sm:$0xff]
    %v283 = vld [vmem:[#allocation5 + $0x580] sm:$0xff]
    %v284 = vld [vmem:[#allocation5 + $0x588] sm:$0xff]
    %v285 = vld [vmem:[#allocation5 + $0x590] sm:$0xff]
    %v286 = vld [vmem:[#allocation5 + $0x598] sm:$0xff]
    %v287 = vld [vmem:[#allocation5 + $0x5a0] sm:$0xff]
    %v288 = vld [vmem:[#allocation5 + $0x5a8] sm:$0xff]
    %v289 = vld [vmem:[#allocation5 + $0x5b0] sm:$0xff]
    %v290 = vld [vmem:[#allocation5 + $0x5b8] sm:$0xff]
    %v291 = vld [vmem:[#allocation5 + $0x5c0] sm:$0xff]
    %v292 = vld [vmem:[#allocation5 + $0x5c8] sm:$0xff]
    %v293 = vld [vmem:[#allocation5 + $0x5d0] sm:$0xff]
    %v294 = vld [vmem:[#allocation5 + $0x5d8] sm:$0xff]
    %v295 = vld [vmem:[#allocation5 + $0x5e0] sm:$0xff]
    %v296 = vld [vmem:[#allocation5 + $0x5e8] sm:$0xff]
    %v297 = vld [vmem:[#allocation5 + $0x5f0] sm:$0xff]
    %v298 = vld [vmem:[#allocation5 + $0x5f8] sm:$0xff]
    %v299 = vld [vmem:[#allocation7] sm:$0xff]
    %v301 = vperm.slane %v299, 0
    %v302 = vperm.slane %v299, 1
    %v303 = vperm.slane %v299, 2
    %v304 = vperm.slane %v299, 3
    %v305 = vperm.slane %v299, 4
    %v306 = vperm.slane %v299, 5
    %v307 = vperm.slane %v299, 6
    %v308 = vperm.slane %v299, 7
    %v509 = vunpack.c.l.b16 %v107
    %v510 = vunpack.c.h.b16 %v107
    %v511 = vunpack.c.l.b16 %v108
    %v512 = vunpack.c.h.b16 %v108
    %v513 = vunpack.c.l.b16 %v109
    %v514 = vunpack.c.h.b16 %v109
    %v515 = vunpack.c.l.b16 %v110
    %v516 = vunpack.c.h.b16 %v110
    %v517 = vunpack.c.l.b16 %v111
    %v518 = vunpack.c.h.b16 %v111
    %v519 = vunpack.c.l.b16 %v112
    %v520 = vunpack.c.h.b16 %v112
    %v521 = vunpack.c.l.b16 %v113
    %v522 = vunpack.c.h.b16 %v113
    %v523 = vunpack.c.l.b16 %v114
    %v524 = vunpack.c.h.b16 %v114
    %v525 = vunpack.c.l.b16 %v115
    %v526 = vunpack.c.h.b16 %v115
    %v527 = vunpack.c.l.b16 %v116
    %v528 = vunpack.c.h.b16 %v116
    %v529 = vunpack.c.l.b16 %v117
    %v530 = vunpack.c.h.b16 %v117
    %v531 = vunpack.c.l.b16 %v118
    %v532 = vunpack.c.h.b16 %v118
    %v533 = vunpack.c.l.b16 %v119
    %v534 = vunpack.c.h.b16 %v119
    %v535 = vunpack.c.l.b16 %v120
    %v536 = vunpack.c.h.b16 %v120
    %v537 = vunpack.c.l.b16 %v121
    %v538 = vunpack.c.h.b16 %v121
    %v539 = vunpack.c.l.b16 %v122
    %v540 = vunpack.c.h.b16 %v122
    %v541 = vunpack.c.l.b16 %v123
    %v542 = vunpack.c.h.b16 %v123
    %v543 = vunpack.c.l.b16 %v124
    %v544 = vunpack.c.h.b16 %v124
    %v545 = vunpack.c.l.b16 %v125
    %v546 = vunpack.c.h.b16 %v125
    %v547 = vunpack.c.l.b16 %v126
    %v548 = vunpack.c.h.b16 %v126
    %v549 = vunpack.c.l.b16 %v127
    %v550 = vunpack.c.h.b16 %v127
    %v551 = vunpack.c.l.b16 %v128
    %v552 = vunpack.c.h.b16 %v128
    %v553 = vunpack.c.l.b16 %v129
    %v554 = vunpack.c.h.b16 %v129
    %v555 = vunpack.c.l.b16 %v130
    %v556 = vunpack.c.h.b16 %v130
    %v557 = vunpack.c.l.b16 %v131
    %v558 = vunpack.c.h.b16 %v131
    %v559 = vunpack.c.l.b16 %v132
    %v560 = vunpack.c.h.b16 %v132
    %v561 = vunpack.c.l.b16 %v133
    %v562 = vunpack.c.h.b16 %v133
    %v563 = vunpack.c.l.b16 %v134
    %v564 = vunpack.c.h.b16 %v134
    %v565 = vunpack.c.l.b16 %v135
    %v566 = vunpack.c.h.b16 %v135
    %v567 = vunpack.c.l.b16 %v136
    %v568 = vunpack.c.h.b16 %v136
    %v569 = vunpack.c.l.b16 %v137
    %v570 = vunpack.c.h.b16 %v137
    %v571 = vunpack.c.l.b16 %v138
    %v572 = vunpack.c.h.b16 %v138
    %v573 = vunpack.c.l.b16 %v139
    %v574 = vunpack.c.h.b16 %v139
    %v575 = vunpack.c.l.b16 %v140
    %v576 = vunpack.c.h.b16 %v140
    %v577 = vunpack.c.l.b16 %v141
    %v578 = vunpack.c.h.b16 %v141
    %v579 = vunpack.c.l.b16 %v142
    %v580 = vunpack.c.h.b16 %v142
    %v581 = vunpack.c.l.b16 %v143
    %v582 = vunpack.c.h.b16 %v143
    %v583 = vunpack.c.l.b16 %v144
    %v584 = vunpack.c.h.b16 %v144
    %v585 = vunpack.c.l.b16 %v145
    %v586 = vunpack.c.h.b16 %v145
    %v587 = vunpack.c.l.b16 %v146
    %v588 = vunpack.c.h.b16 %v146
    %v589 = vunpack.c.l.b16 %v147
    %v590 = vunpack.c.h.b16 %v147
    %v591 = vunpack.c.l.b16 %v148
    %v592 = vunpack.c.h.b16 %v148
    %v593 = vunpack.c.l.b16 %v149
    %v594 = vunpack.c.h.b16 %v149
    %v595 = vunpack.c.l.b16 %v150
    %v596 = vunpack.c.h.b16 %v150
    %v597 = vunpack.c.l.b16 %v151
    %v598 = vunpack.c.h.b16 %v151
    %v599 = vunpack.c.l.b16 %v152
    %v600 = vunpack.c.h.b16 %v152
    %v601 = vunpack.c.l.b16 %v153
    %v602 = vunpack.c.h.b16 %v153
    %v603 = vunpack.c.l.b16 %v154
    %v604 = vunpack.c.h.b16 %v154
    %v605 = vunpack.c.l.b16 %v155
    %v606 = vunpack.c.h.b16 %v155
    %v607 = vunpack.c.l.b16 %v156
    %v608 = vunpack.c.h.b16 %v156
    %v609 = vunpack.c.l.b16 %v157
    %v610 = vunpack.c.h.b16 %v157
    %v611 = vunpack.c.l.b16 %v158
    %v612 = vunpack.c.h.b16 %v158
    %v613 = vunpack.c.l.b16 %v159
    %v614 = vunpack.c.h.b16 %v159
    %v615 = vunpack.c.l.b16 %v160
    %v616 = vunpack.c.h.b16 %v160
    %v617 = vunpack.c.l.b16 %v161
    %v618 = vunpack.c.h.b16 %v161
    %v619 = vunpack.c.l.b16 %v162
    %v620 = vunpack.c.h.b16 %v162
    %v621 = vunpack.c.l.b16 %v163
    %v622 = vunpack.c.h.b16 %v163
    %v623 = vunpack.c.l.b16 %v164
    %v624 = vunpack.c.h.b16 %v164
    %v625 = vunpack.c.l.b16 %v165
    %v626 = vunpack.c.h.b16 %v165
    %v627 = vunpack.c.l.b16 %v166
    %v628 = vunpack.c.h.b16 %v166
    %v629 = vunpack.c.l.b16 %v167
    %v630 = vunpack.c.h.b16 %v167
    %v631 = vunpack.c.l.b16 %v168
    %v632 = vunpack.c.h.b16 %v168
    %v633 = vunpack.c.l.b16 %v169
    %v634 = vunpack.c.h.b16 %v169
    %v635 = vunpack.c.l.b16 %v170
    %v636 = vunpack.c.h.b16 %v170
    %v637 = vunpack.c.l.b16 %v171
    %v638 = vunpack.c.h.b16 %v171
    %v639 = vunpack.c.l.b16 %v172
    %v640 = vunpack.c.h.b16 %v172
    %v641 = vunpack.c.l.b16 %v173
    %v642 = vunpack.c.h.b16 %v173
    %v643 = vunpack.c.l.b16 %v174
    %v644 = vunpack.c.h.b16 %v174
    %v645 = vunpack.c.l.b16 %v175
    %v646 = vunpack.c.h.b16 %v175
    %v647 = vunpack.c.l.b16 %v176
    %v648 = vunpack.c.h.b16 %v176
    %v649 = vunpack.c.l.b16 %v177
    %v650 = vunpack.c.h.b16 %v177
    %v651 = vunpack.c.l.b16 %v178
    %v652 = vunpack.c.h.b16 %v178
    %v653 = vunpack.c.l.b16 %v179
    %v654 = vunpack.c.h.b16 %v179
    %v655 = vunpack.c.l.b16 %v180
    %v656 = vunpack.c.h.b16 %v180
    %v657 = vunpack.c.l.b16 %v181
    %v658 = vunpack.c.h.b16 %v181
    %v659 = vunpack.c.l.b16 %v182
    %v660 = vunpack.c.h.b16 %v182
    %v661 = vunpack.c.l.b16 %v183
    %v662 = vunpack.c.h.b16 %v183
    %v663 = vunpack.c.l.b16 %v184
    %v664 = vunpack.c.h.b16 %v184
    %v665 = vunpack.c.l.b16 %v185
    %v666 = vunpack.c.h.b16 %v185
    %v667 = vunpack.c.l.b16 %v186
    %v668 = vunpack.c.h.b16 %v186
    %v669 = vunpack.c.l.b16 %v187
    %v670 = vunpack.c.h.b16 %v187
    %v671 = vunpack.c.l.b16 %v188
    %v672 = vunpack.c.h.b16 %v188
    %v673 = vunpack.c.l.b16 %v189
    %v674 = vunpack.c.h.b16 %v189
    %v675 = vunpack.c.l.b16 %v190
    %v676 = vunpack.c.h.b16 %v190
    %v677 = vunpack.c.l.b16 %v191
    %v678 = vunpack.c.h.b16 %v191
    %v679 = vunpack.c.l.b16 %v192
    %v680 = vunpack.c.h.b16 %v192
    %v681 = vunpack.c.l.b16 %v193
    %v682 = vunpack.c.h.b16 %v193
    %v683 = vunpack.c.l.b16 %v194
    %v684 = vunpack.c.h.b16 %v194
    %v685 = vunpack.c.l.b16 %v195
    %v686 = vunpack.c.h.b16 %v195
    %v687 = vunpack.c.l.b16 %v196
    %v688 = vunpack.c.h.b16 %v196
    %v689 = vunpack.c.l.b16 %v197
    %v690 = vunpack.c.h.b16 %v197
    %v691 = vunpack.c.l.b16 %v198
    %v692 = vunpack.c.h.b16 %v198
    %v693 = vunpack.c.l.b16 %v199
    %v694 = vunpack.c.h.b16 %v199
    %v695 = vunpack.c.l.b16 %v200
    %v696 = vunpack.c.h.b16 %v200
    %v697 = vunpack.c.l.b16 %v201
    %v698 = vunpack.c.h.b16 %v201
    %v699 = vunpack.c.l.b16 %v202
    %v700 = vunpack.c.h.b16 %v202
    %v701 = vunpack.c.l.b16 %v203
    %v702 = vunpack.c.h.b16 %v203
    %v703 = vunpack.c.l.b16 %v204
    %v704 = vunpack.c.h.b16 %v204
    %v705 = vunpack.c.l.b16 %v205
    %v706 = vunpack.c.h.b16 %v205
    %v707 = vunpack.c.l.b16 %v206
    %v708 = vunpack.c.h.b16 %v206
    %v709 = vunpack.c.l.b16 %v207
    %v710 = vunpack.c.h.b16 %v207
    %v711 = vunpack.c.l.b16 %v208
    %v712 = vunpack.c.h.b16 %v208
    %v713 = vunpack.c.l.b16 %v209
    %v714 = vunpack.c.h.b16 %v209
    %v715 = vunpack.c.l.b16 %v210
    %v716 = vunpack.c.h.b16 %v210
    %v717 = vunpack.c.l.b16 %v211
    %v718 = vunpack.c.h.b16 %v211
    %v719 = vunpack.c.l.b16 %v212
    %v720 = vunpack.c.h.b16 %v212
    %v721 = vunpack.c.l.b16 %v213
    %v722 = vunpack.c.h.b16 %v213
    %v723 = vunpack.c.l.b16 %v214
    %v724 = vunpack.c.h.b16 %v214
    %v725 = vunpack.c.l.b16 %v215
    %v726 = vunpack.c.h.b16 %v215
    %v727 = vunpack.c.l.b16 %v216
    %v728 = vunpack.c.h.b16 %v216
    %v729 = vunpack.c.l.b16 %v217
    %v730 = vunpack.c.h.b16 %v217
    %v731 = vunpack.c.l.b16 %v218
    %v732 = vunpack.c.h.b16 %v218
    %v733 = vunpack.c.l.b16 %v219
    %v734 = vunpack.c.h.b16 %v219
    %v735 = vunpack.c.l.b16 %v220
    %v736 = vunpack.c.h.b16 %v220
    %v737 = vunpack.c.l.b16 %v221
    %v738 = vunpack.c.h.b16 %v221
    %v739 = vunpack.c.l.b16 %v222
    %v740 = vunpack.c.h.b16 %v222
    %v741 = vunpack.c.l.b16 %v223
    %v742 = vunpack.c.h.b16 %v223
    %v743 = vunpack.c.l.b16 %v224
    %v744 = vunpack.c.h.b16 %v224
    %v745 = vunpack.c.l.b16 %v225
    %v746 = vunpack.c.h.b16 %v225
    %v747 = vunpack.c.l.b16 %v226
    %v748 = vunpack.c.h.b16 %v226
    %v749 = vunpack.c.l.b16 %v227
    %v750 = vunpack.c.h.b16 %v227
    %v751 = vunpack.c.l.b16 %v228
    %v752 = vunpack.c.h.b16 %v228
    %v753 = vunpack.c.l.b16 %v229
    %v754 = vunpack.c.h.b16 %v229
    %v755 = vunpack.c.l.b16 %v230
    %v756 = vunpack.c.h.b16 %v230
    %v757 = vunpack.c.l.b16 %v231
    %v758 = vunpack.c.h.b16 %v231
    %v759 = vunpack.c.l.b16 %v232
    %v760 = vunpack.c.h.b16 %v232
    %v761 = vunpack.c.l.b16 %v233
    %v762 = vunpack.c.h.b16 %v233
    %v763 = vunpack.c.l.b16 %v234
    %v764 = vunpack.c.h.b16 %v234
    %v765 = vunpack.c.l.b16 %v235
    %v766 = vunpack.c.h.b16 %v235
    %v767 = vunpack.c.l.b16 %v236
    %v768 = vunpack.c.h.b16 %v236
    %v769 = vunpack.c.l.b16 %v237
    %v770 = vunpack.c.h.b16 %v237
    %v771 = vunpack.c.l.b16 %v238
    %v772 = vunpack.c.h.b16 %v238
    %v773 = vunpack.c.l.b16 %v239
    %v774 = vunpack.c.h.b16 %v239
    %v775 = vunpack.c.l.b16 %v240
    %v776 = vunpack.c.h.b16 %v240
    %v777 = vunpack.c.l.b16 %v241
    %v778 = vunpack.c.h.b16 %v241
    %v779 = vunpack.c.l.b16 %v242
    %v780 = vunpack.c.h.b16 %v242
    %v781 = vunpack.c.l.b16 %v243
    %v782 = vunpack.c.h.b16 %v243
    %v783 = vunpack.c.l.b16 %v244
    %v784 = vunpack.c.h.b16 %v244
    %v785 = vunpack.c.l.b16 %v245
    %v786 = vunpack.c.h.b16 %v245
    %v787 = vunpack.c.l.b16 %v246
    %v788 = vunpack.c.h.b16 %v246
    %v789 = vunpack.c.l.b16 %v247
    %v790 = vunpack.c.h.b16 %v247
    %v791 = vunpack.c.l.b16 %v248
    %v792 = vunpack.c.h.b16 %v248
    %v793 = vunpack.c.l.b16 %v249
    %v794 = vunpack.c.h.b16 %v249
    %v795 = vunpack.c.l.b16 %v250
    %v796 = vunpack.c.h.b16 %v250
    %v797 = vunpack.c.l.b16 %v251
    %v798 = vunpack.c.h.b16 %v251
    %v799 = vunpack.c.l.b16 %v252
    %v800 = vunpack.c.h.b16 %v252
    %v801 = vunpack.c.l.b16 %v253
    %v802 = vunpack.c.h.b16 %v253
    %v803 = vunpack.c.l.b16 %v254
    %v804 = vunpack.c.h.b16 %v254
    %v805 = vunpack.c.l.b16 %v255
    %v806 = vunpack.c.h.b16 %v255
    %v807 = vunpack.c.l.b16 %v256
    %v808 = vunpack.c.h.b16 %v256
    %v809 = vunpack.c.l.b16 %v257
    %v810 = vunpack.c.h.b16 %v257
    %v811 = vunpack.c.l.b16 %v258
    %v812 = vunpack.c.h.b16 %v258
    %v813 = vunpack.c.l.b16 %v259
    %v814 = vunpack.c.h.b16 %v259
    %v815 = vunpack.c.l.b16 %v260
    %v816 = vunpack.c.h.b16 %v260
    %v817 = vunpack.c.l.b16 %v261
    %v818 = vunpack.c.h.b16 %v261
    %v819 = vunpack.c.l.b16 %v262
    %v820 = vunpack.c.h.b16 %v262
    %v821 = vunpack.c.l.b16 %v263
    %v822 = vunpack.c.h.b16 %v263
    %v823 = vunpack.c.l.b16 %v264
    %v824 = vunpack.c.h.b16 %v264
    %v825 = vunpack.c.l.b16 %v265
    %v826 = vunpack.c.h.b16 %v265
    %v827 = vunpack.c.l.b16 %v266
    %v828 = vunpack.c.h.b16 %v266
    %v829 = vunpack.c.l.b16 %v267
    %v830 = vunpack.c.h.b16 %v267
    %v831 = vunpack.c.l.b16 %v268
    %v832 = vunpack.c.h.b16 %v268
    %v833 = vunpack.c.l.b16 %v269
    %v834 = vunpack.c.h.b16 %v269
    %v835 = vunpack.c.l.b16 %v270
    %v836 = vunpack.c.h.b16 %v270
    %v837 = vunpack.c.l.b16 %v271
    %v838 = vunpack.c.h.b16 %v271
    %v839 = vunpack.c.l.b16 %v272
    %v840 = vunpack.c.h.b16 %v272
    %v841 = vunpack.c.l.b16 %v273
    %v842 = vunpack.c.h.b16 %v273
    %v843 = vunpack.c.l.b16 %v274
    %v844 = vunpack.c.h.b16 %v274
    %v845 = vunpack.c.l.b16 %v275
    %v846 = vunpack.c.h.b16 %v275
    %v847 = vunpack.c.l.b16 %v276
    %v848 = vunpack.c.h.b16 %v276
    %v849 = vunpack.c.l.b16 %v277
    %v850 = vunpack.c.h.b16 %v277
    %v851 = vunpack.c.l.b16 %v278
    %v852 = vunpack.c.h.b16 %v278
    %v853 = vunpack.c.l.b16 %v279
    %v854 = vunpack.c.h.b16 %v279
    %v855 = vunpack.c.l.b16 %v280
    %v856 = vunpack.c.h.b16 %v280
    %v857 = vunpack.c.l.b16 %v281
    %v858 = vunpack.c.h.b16 %v281
    %v859 = vunpack.c.l.b16 %v282
    %v860 = vunpack.c.h.b16 %v282
    %v861 = vunpack.c.l.b16 %v283
    %v862 = vunpack.c.h.b16 %v283
    %v863 = vunpack.c.l.b16 %v284
    %v864 = vunpack.c.h.b16 %v284
    %v865 = vunpack.c.l.b16 %v285
    %v866 = vunpack.c.h.b16 %v285
    %v867 = vunpack.c.l.b16 %v286
    %v868 = vunpack.c.h.b16 %v286
    %v869 = vunpack.c.l.b16 %v287
    %v870 = vunpack.c.h.b16 %v287
    %v871 = vunpack.c.l.b16 %v288
    %v872 = vunpack.c.h.b16 %v288
    %v873 = vunpack.c.l.b16 %v289
    %v874 = vunpack.c.h.b16 %v289
    %v875 = vunpack.c.l.b16 %v290
    %v876 = vunpack.c.h.b16 %v290
    %v877 = vunpack.c.l.b16 %v291
    %v878 = vunpack.c.h.b16 %v291
    %v879 = vunpack.c.l.b16 %v292
    %v880 = vunpack.c.h.b16 %v292
    %v881 = vunpack.c.l.b16 %v293
    %v882 = vunpack.c.h.b16 %v293
    %v883 = vunpack.c.l.b16 %v294
    %v884 = vunpack.c.h.b16 %v294
    %v885 = vunpack.c.l.b16 %v295
    %v886 = vunpack.c.h.b16 %v295
    %v887 = vunpack.c.l.b16 %v296
    %v888 = vunpack.c.h.b16 %v296
    %v889 = vunpack.c.l.b16 %v297
    %v890 = vunpack.c.h.b16 %v297
    %v891 = vunpack.c.l.b16 %v298
    %v892 = vunpack.c.h.b16 %v298
    %v893 = vpack.c.b16 %v517, %v509
    %v894 = vpack.c.b16 %v518, %v510
    %v895 = vpack.c.b16 %v519, %v511
    %v896 = vpack.c.b16 %v520, %v512
    %v897 = vpack.c.b16 %v521, %v513
    %v898 = vpack.c.b16 %v522, %v514
    %v899 = vpack.c.b16 %v523, %v515
    %v900 = vpack.c.b16 %v524, %v516
    %v901 = vpack.c.b16 %v533, %v525
    %v902 = vpack.c.b16 %v534, %v526
    %v903 = vpack.c.b16 %v535, %v527
    %v904 = vpack.c.b16 %v536, %v528
    %v905 = vpack.c.b16 %v537, %v529
    %v906 = vpack.c.b16 %v538, %v530
    %v907 = vpack.c.b16 %v539, %v531
    %v908 = vpack.c.b16 %v540, %v532
    %v909 = vpack.c.b16 %v549, %v541
    %v910 = vpack.c.b16 %v550, %v542
    %v911 = vpack.c.b16 %v551, %v543
    %v912 = vpack.c.b16 %v552, %v544
    %v913 = vpack.c.b16 %v553, %v545
    %v914 = vpack.c.b16 %v554, %v546
    %v915 = vpack.c.b16 %v555, %v547
    %v916 = vpack.c.b16 %v556, %v548
    %v917 = vpack.c.b16 %v565, %v557
    %v918 = vpack.c.b16 %v566, %v558
    %v919 = vpack.c.b16 %v567, %v559
    %v920 = vpack.c.b16 %v568, %v560
    %v921 = vpack.c.b16 %v569, %v561
    %v922 = vpack.c.b16 %v570, %v562
    %v923 = vpack.c.b16 %v571, %v563
    %v924 = vpack.c.b16 %v572, %v564
    %v925 = vpack.c.b16 %v581, %v573
    %v926 = vpack.c.b16 %v582, %v574
    %v927 = vpack.c.b16 %v583, %v575
    %v928 = vpack.c.b16 %v584, %v576
    %v929 = vpack.c.b16 %v585, %v577
    %v930 = vpack.c.b16 %v586, %v578
    %v931 = vpack.c.b16 %v587, %v579
    %v932 = vpack.c.b16 %v588, %v580
    %v933 = vpack.c.b16 %v597, %v589
    %v934 = vpack.c.b16 %v598, %v590
    %v935 = vpack.c.b16 %v599, %v591
    %v936 = vpack.c.b16 %v600, %v592
    %v937 = vpack.c.b16 %v601, %v593
    %v938 = vpack.c.b16 %v602, %v594
    %v939 = vpack.c.b16 %v603, %v595
    %v940 = vpack.c.b16 %v604, %v596
    %v941 = vpack.c.b16 %v613, %v605
    %v942 = vpack.c.b16 %v614, %v606
    %v943 = vpack.c.b16 %v615, %v607
    %v944 = vpack.c.b16 %v616, %v608
    %v945 = vpack.c.b16 %v617, %v609
    %v946 = vpack.c.b16 %v618, %v610
    %v947 = vpack.c.b16 %v619, %v611
    %v948 = vpack.c.b16 %v620, %v612
    %v949 = vpack.c.b16 %v629, %v621
    %v950 = vpack.c.b16 %v630, %v622
    %v951 = vpack.c.b16 %v631, %v623
    %v952 = vpack.c.b16 %v632, %v624
    %v953 = vpack.c.b16 %v633, %v625
    %v954 = vpack.c.b16 %v634, %v626
    %v955 = vpack.c.b16 %v635, %v627
    %v956 = vpack.c.b16 %v636, %v628
    %v957 = vpack.c.b16 %v645, %v637
    %v958 = vpack.c.b16 %v646, %v638
    %v959 = vpack.c.b16 %v647, %v639
    %v960 = vpack.c.b16 %v648, %v640
    %v961 = vpack.c.b16 %v649, %v641
    %v962 = vpack.c.b16 %v650, %v642
    %v963 = vpack.c.b16 %v651, %v643
    %v964 = vpack.c.b16 %v652, %v644
    %v965 = vpack.c.b16 %v661, %v653
    %v966 = vpack.c.b16 %v662, %v654
    %v967 = vpack.c.b16 %v663, %v655
    %v968 = vpack.c.b16 %v664, %v656
    %v969 = vpack.c.b16 %v665, %v657
    %v970 = vpack.c.b16 %v666, %v658
    %v971 = vpack.c.b16 %v667, %v659
    %v972 = vpack.c.b16 %v668, %v660
    %v973 = vpack.c.b16 %v677, %v669
    %v974 = vpack.c.b16 %v678, %v670
    %v975 = vpack.c.b16 %v679, %v671
    %v976 = vpack.c.b16 %v680, %v672
    %v977 = vpack.c.b16 %v681, %v673
    %v978 = vpack.c.b16 %v682, %v674
    %v979 = vpack.c.b16 %v683, %v675
    %v980 = vpack.c.b16 %v684, %v676
    %v981 = vpack.c.b16 %v693, %v685
    %v982 = vpack.c.b16 %v694, %v686
    %v983 = vpack.c.b16 %v695, %v687
    %v984 = vpack.c.b16 %v696, %v688
    %v985 = vpack.c.b16 %v697, %v689
    %v986 = vpack.c.b16 %v698, %v690
    %v987 = vpack.c.b16 %v699, %v691
    %v988 = vpack.c.b16 %v700, %v692
    %v989 = vpack.c.b16 %v709, %v701
    %v990 = vpack.c.b16 %v710, %v702
    %v991 = vpack.c.b16 %v711, %v703
    %v992 = vpack.c.b16 %v712, %v704
    %v993 = vpack.c.b16 %v713, %v705
    %v994 = vpack.c.b16 %v714, %v706
    %v995 = vpack.c.b16 %v715, %v707
    %v996 = vpack.c.b16 %v716, %v708
    %v997 = vpack.c.b16 %v725, %v717
    %v998 = vpack.c.b16 %v726, %v718
    %v999 = vpack.c.b16 %v727, %v719
    %v1000 = vpack.c.b16 %v728, %v720
    %v1001 = vpack.c.b16 %v729, %v721
    %v1002 = vpack.c.b16 %v730, %v722
    %v1003 = vpack.c.b16 %v731, %v723
    %v1004 = vpack.c.b16 %v732, %v724
    %v1005 = vpack.c.b16 %v741, %v733
    %v1006 = vpack.c.b16 %v742, %v734
    %v1007 = vpack.c.b16 %v743, %v735
    %v1008 = vpack.c.b16 %v744, %v736
    %v1009 = vpack.c.b16 %v745, %v737
    %v1010 = vpack.c.b16 %v746, %v738
    %v1011 = vpack.c.b16 %v747, %v739
    %v1012 = vpack.c.b16 %v748, %v740
    %v1013 = vpack.c.b16 %v757, %v749
    %v1014 = vpack.c.b16 %v758, %v750
    %v1015 = vpack.c.b16 %v759, %v751
    %v1016 = vpack.c.b16 %v760, %v752
    %v1017 = vpack.c.b16 %v761, %v753
    %v1018 = vpack.c.b16 %v762, %v754
    %v1019 = vpack.c.b16 %v763, %v755
    %v1020 = vpack.c.b16 %v764, %v756
    %v1021 = vpack.c.b16 %v773, %v765
    %v1022 = vpack.c.b16 %v774, %v766
    %v1023 = vpack.c.b16 %v775, %v767
    %v1024 = vpack.c.b16 %v776, %v768
    %v1025 = vpack.c.b16 %v777, %v769
    %v1026 = vpack.c.b16 %v778, %v770
    %v1027 = vpack.c.b16 %v779, %v771
    %v1028 = vpack.c.b16 %v780, %v772
    %v1029 = vpack.c.b16 %v789, %v781
    %v1030 = vpack.c.b16 %v790, %v782
    %v1031 = vpack.c.b16 %v791, %v783
    %v1032 = vpack.c.b16 %v792, %v784
    %v1033 = vpack.c.b16 %v793, %v785
    %v1034 = vpack.c.b16 %v794, %v786
    %v1035 = vpack.c.b16 %v795, %v787
    %v1036 = vpack.c.b16 %v796, %v788
    %v1037 = vpack.c.b16 %v805, %v797
    %v1038 = vpack.c.b16 %v806, %v798
    %v1039 = vpack.c.b16 %v807, %v799
    %v1040 = vpack.c.b16 %v808, %v800
    %v1041 = vpack.c.b16 %v809, %v801
    %v1042 = vpack.c.b16 %v810, %v802
    %v1043 = vpack.c.b16 %v811, %v803
    %v1044 = vpack.c.b16 %v812, %v804
    %v1045 = vpack.c.b16 %v821, %v813
    %v1046 = vpack.c.b16 %v822, %v814
    %v1047 = vpack.c.b16 %v823, %v815
    %v1048 = vpack.c.b16 %v824, %v816
    %v1049 = vpack.c.b16 %v825, %v817
    %v1050 = vpack.c.b16 %v826, %v818
    %v1051 = vpack.c.b16 %v827, %v819
    %v1052 = vpack.c.b16 %v828, %v820
    %v1053 = vpack.c.b16 %v837, %v829
    %v1054 = vpack.c.b16 %v838, %v830
    %v1055 = vpack.c.b16 %v839, %v831
    %v1056 = vpack.c.b16 %v840, %v832
    %v1057 = vpack.c.b16 %v841, %v833
    %v1058 = vpack.c.b16 %v842, %v834
    %v1059 = vpack.c.b16 %v843, %v835
    %v1060 = vpack.c.b16 %v844, %v836
    %v1061 = vpack.c.b16 %v853, %v845
    %v1062 = vpack.c.b16 %v854, %v846
    %v1063 = vpack.c.b16 %v855, %v847
    %v1064 = vpack.c.b16 %v856, %v848
    %v1065 = vpack.c.b16 %v857, %v849
    %v1066 = vpack.c.b16 %v858, %v850
    %v1067 = vpack.c.b16 %v859, %v851
    %v1068 = vpack.c.b16 %v860, %v852
    %v1069 = vpack.c.b16 %v869, %v861
    %v1070 = vpack.c.b16 %v870, %v862
    %v1071 = vpack.c.b16 %v871, %v863
    %v1072 = vpack.c.b16 %v872, %v864
    %v1073 = vpack.c.b16 %v873, %v865
    %v1074 = vpack.c.b16 %v874, %v866
    %v1075 = vpack.c.b16 %v875, %v867
    %v1076 = vpack.c.b16 %v876, %v868
    %v1077 = vpack.c.b16 %v885, %v877
    %v1078 = vpack.c.b16 %v886, %v878
    %v1079 = vpack.c.b16 %v887, %v879
    %v1080 = vpack.c.b16 %v888, %v880
    %v1081 = vpack.c.b16 %v889, %v881
    %v1082 = vpack.c.b16 %v890, %v882
    %v1083 = vpack.c.b16 %v891, %v883
    %v1084 = vpack.c.b16 %v892, %v884
    %1277 = vmatpush.bf16.msra.mxu0 %v949
    %1278 = vmatpush.bf16.msra.mxu0 %v941
    %1279 = vmatpush.bf16.msra.mxu0 %v933
    %1280 = vmatpush.bf16.msra.mxu0 %v925
    %1281 = vmatpush.bf16.msra.mxu0 %v917
    %1282 = vmatpush.bf16.msra.mxu0 %v909
    %1283 = vmatpush.bf16.msra.mxu0 %v901
    %1284 = vmatpush.bf16.msra.mxu0 %v893
    %1285 = vmatmul.bf16.gmra.mxu0 %v104
    %v1286 = vpop.f32.mrf.mxu0
    %v1287 = vadd.f32 %v301, %v1286
    %v1288 = vpop.f32.mrf.mxu0
    %1289 = vdwg.mxu0
    %1290 = vmatpush.bf16.msra.mxu0 %v1013
    %1291 = vmatpush.bf16.msra.mxu0 %v1005
    %1292 = vmatpush.bf16.msra.mxu0 %v997
    %1293 = vmatpush.bf16.msra.mxu0 %v989
    %1294 = vmatpush.bf16.msra.mxu0 %v981
    %1295 = vmatpush.bf16.msra.mxu0 %v973
    %1296 = vmatpush.bf16.msra.mxu0 %v965
    %1297 = vmatpush.bf16.msra.mxu0 %v957
    %1298 = vmatmul.bf16.gmra.mxu0 %v105
    %v1299 = vpop.f32.mrf.mxu0
    %v1300 = vadd.f32 %v1287, %v1299
    %v1301 = vpop.f32.mrf.mxu0
    %1302 = vdwg.mxu0
    %1303 = vmatpush.bf16.msra.mxu0 %v1077
    %1304 = vmatpush.bf16.msra.mxu0 %v1069
    %1305 = vmatpush.bf16.msra.mxu0 %v1061
    %1306 = vmatpush.bf16.msra.mxu0 %v1053
    %1307 = vmatpush.bf16.msra.mxu0 %v1045
    %1308 = vmatpush.bf16.msra.mxu0 %v1037
    %1309 = vmatpush.bf16.msra.mxu0 %v1029
    %1310 = vmatpush.bf16.msra.mxu0 %v1021
    %1311 = vmatmul.bf16.gmra.mxu0 %v106
    %v1312 = vpop.f32.mrf.mxu0
    %v1313 = vadd.f32 %v1300, %v1312
    %v1314 = vpop.f32.mrf.mxu0
    %1315 = vdwg.mxu0
    %1316 = vmatpush.bf16.msra.mxu0 %v950
    %1317 = vmatpush.bf16.msra.mxu0 %v942
    %1318 = vmatpush.bf16.msra.mxu0 %v934
    %1319 = vmatpush.bf16.msra.mxu0 %v926
    %1320 = vmatpush.bf16.msra.mxu0 %v918
    %1321 = vmatpush.bf16.msra.mxu0 %v910
    %1322 = vmatpush.bf16.msra.mxu0 %v902
    %1323 = vmatpush.bf16.msra.mxu0 %v894
    %1324 = vmatmul.bf16.gmra.mxu0 %v104
    %v1325 = vpop.f32.mrf.mxu0
    %v1326 = vadd.f32 %v302, %v1325
    %v1327 = vpop.f32.mrf.mxu0
    %1328 = vdwg.mxu0
    %1329 = vmatpush.bf16.msra.mxu0 %v1014
    %1330 = vmatpush.bf16.msra.mxu0 %v1006
    %1331 = vmatpush.bf16.msra.mxu0 %v998
    %1332 = vmatpush.bf16.msra.mxu0 %v990
    %1333 = vmatpush.bf16.msra.mxu0 %v982
    %1334 = vmatpush.bf16.msra.mxu0 %v974
    %1335 = vmatpush.bf16.msra.mxu0 %v966
    %1336 = vmatpush.bf16.msra.mxu0 %v958
    %1337 = vmatmul.bf16.gmra.mxu0 %v105
    %v1338 = vpop.f32.mrf.mxu0
    %v1339 = vadd.f32 %v1326, %v1338
    %v1340 = vpop.f32.mrf.mxu0
    %1341 = vdwg.mxu0
    %1342 = vmatpush.bf16.msra.mxu0 %v1078
    %1343 = vmatpush.bf16.msra.mxu0 %v1070
    %1344 = vmatpush.bf16.msra.mxu0 %v1062
    %1345 = vmatpush.bf16.msra.mxu0 %v1054
    %1346 = vmatpush.bf16.msra.mxu0 %v1046
    %1347 = vmatpush.bf16.msra.mxu0 %v1038
    %1348 = vmatpush.bf16.msra.mxu0 %v1030
    %1349 = vmatpush.bf16.msra.mxu0 %v1022
    %1350 = vmatmul.bf16.gmra.mxu0 %v106
    %v1351 = vpop.f32.mrf.mxu0
    %v1352 = vadd.f32 %v1339, %v1351
    %v1353 = vpop.f32.mrf.mxu0
    %1354 = vdwg.mxu0
    %1355 = vmatpush.bf16.msra.mxu0 %v951
    %1356 = vmatpush.bf16.msra.mxu0 %v943
    %1357 = vmatpush.bf16.msra.mxu0 %v935
    %1358 = vmatpush.bf16.msra.mxu0 %v927
    %1359 = vmatpush.bf16.msra.mxu0 %v919
    %1360 = vmatpush.bf16.msra.mxu0 %v911
    %1361 = vmatpush.bf16.msra.mxu0 %v903
    %1362 = vmatpush.bf16.msra.mxu0 %v895
    %1363 = vmatmul.bf16.gmra.mxu0 %v104
    %v1364 = vpop.f32.mrf.mxu0
    %v1365 = vadd.f32 %v303, %v1364
    %v1366 = vpop.f32.mrf.mxu0
    %1367 = vdwg.mxu0
    %1368 = vmatpush.bf16.msra.mxu0 %v1015
    %1369 = vmatpush.bf16.msra.mxu0 %v1007
    %1370 = vmatpush.bf16.msra.mxu0 %v999
    %1371 = vmatpush.bf16.msra.mxu0 %v991
    %1372 = vmatpush.bf16.msra.mxu0 %v983
    %1373 = vmatpush.bf16.msra.mxu0 %v975
    %1374 = vmatpush.bf16.msra.mxu0 %v967
    %1375 = vmatpush.bf16.msra.mxu0 %v959
    %1376 = vmatmul.bf16.gmra.mxu0 %v105
    %v1377 = vpop.f32.mrf.mxu0
    %v1378 = vadd.f32 %v1365, %v1377
    %v1379 = vpop.f32.mrf.mxu0
    %1380 = vdwg.mxu0
    %1381 = vmatpush.bf16.msra.mxu0 %v1079
    %1382 = vmatpush.bf16.msra.mxu0 %v1071
    %1383 = vmatpush.bf16.msra.mxu0 %v1063
    %1384 = vmatpush.bf16.msra.mxu0 %v1055
    %1385 = vmatpush.bf16.msra.mxu0 %v1047
    %1386 = vmatpush.bf16.msra.mxu0 %v1039
    %1387 = vmatpush.bf16.msra.mxu0 %v1031
    %1388 = vmatpush.bf16.msra.mxu0 %v1023
    %1389 = vmatmul.bf16.gmra.mxu0 %v106
    %v1390 = vpop.f32.mrf.mxu0
    %v1391 = vadd.f32 %v1378, %v1390
    %v1392 = vpop.f32.mrf.mxu0
    %1393 = vdwg.mxu0
    %1394 = vmatpush.bf16.msra.mxu0 %v952
    %1395 = vmatpush.bf16.msra.mxu0 %v944
    %1396 = vmatpush.bf16.msra.mxu0 %v936
    %1397 = vmatpush.bf16.msra.mxu0 %v928
    %1398 = vmatpush.bf16.msra.mxu0 %v920
    %1399 = vmatpush.bf16.msra.mxu0 %v912
    %1400 = vmatpush.bf16.msra.mxu0 %v904
    %1401 = vmatpush.bf16.msra.mxu0 %v896
    %1402 = vmatmul.bf16.gmra.mxu0 %v104
    %v1403 = vpop.f32.mrf.mxu0
    %v1404 = vadd.f32 %v304, %v1403
    %v1405 = vpop.f32.mrf.mxu0
    %1406 = vdwg.mxu0
    %1407 = vmatpush.bf16.msra.mxu0 %v1016
    %1408 = vmatpush.bf16.msra.mxu0 %v1008
    %1409 = vmatpush.bf16.msra.mxu0 %v1000
    %1410 = vmatpush.bf16.msra.mxu0 %v992
    %1411 = vmatpush.bf16.msra.mxu0 %v984
    %1412 = vmatpush.bf16.msra.mxu0 %v976
    %1413 = vmatpush.bf16.msra.mxu0 %v968
    %1414 = vmatpush.bf16.msra.mxu0 %v960
    %1415 = vmatmul.bf16.gmra.mxu0 %v105
    %v1416 = vpop.f32.mrf.mxu0
    %v1417 = vadd.f32 %v1404, %v1416
    %v1418 = vpop.f32.mrf.mxu0
    %1419 = vdwg.mxu0
    %1420 = vmatpush.bf16.msra.mxu0 %v1080
    %1421 = vmatpush.bf16.msra.mxu0 %v1072
    %1422 = vmatpush.bf16.msra.mxu0 %v1064
    %1423 = vmatpush.bf16.msra.mxu0 %v1056
    %1424 = vmatpush.bf16.msra.mxu0 %v1048
    %1425 = vmatpush.bf16.msra.mxu0 %v1040
    %1426 = vmatpush.bf16.msra.mxu0 %v1032
    %1427 = vmatpush.bf16.msra.mxu0 %v1024
    %1428 = vmatmul.bf16.gmra.mxu0 %v106
    %v1429 = vpop.f32.mrf.mxu0
    %v1430 = vadd.f32 %v1417, %v1429
    %v1431 = vpop.f32.mrf.mxu0
    %1432 = vdwg.mxu0
    %1433 = vmatpush.bf16.msra.mxu0 %v953
    %1434 = vmatpush.bf16.msra.mxu0 %v945
    %1435 = vmatpush.bf16.msra.mxu0 %v937
    %1436 = vmatpush.bf16.msra.mxu0 %v929
    %1437 = vmatpush.bf16.msra.mxu0 %v921
    %1438 = vmatpush.bf16.msra.mxu0 %v913
    %1439 = vmatpush.bf16.msra.mxu0 %v905
    %1440 = vmatpush.bf16.msra.mxu0 %v897
    %1441 = vmatmul.bf16.gmra.mxu0 %v104
    %v1442 = vpop.f32.mrf.mxu0
    %v1443 = vadd.f32 %v305, %v1442
    %v1444 = vpop.f32.mrf.mxu0
    %1445 = vdwg.mxu0
    %1446 = vmatpush.bf16.msra.mxu0 %v1017
    %1447 = vmatpush.bf16.msra.mxu0 %v1009
    %1448 = vmatpush.bf16.msra.mxu0 %v1001
    %1449 = vmatpush.bf16.msra.mxu0 %v993
    %1450 = vmatpush.bf16.msra.mxu0 %v985
    %1451 = vmatpush.bf16.msra.mxu0 %v977
    %1452 = vmatpush.bf16.msra.mxu0 %v969
    %1453 = vmatpush.bf16.msra.mxu0 %v961
    %1454 = vmatmul.bf16.gmra.mxu0 %v105
    %v1455 = vpop.f32.mrf.mxu0
    %v1456 = vadd.f32 %v1443, %v1455
    %v1457 = vpop.f32.mrf.mxu0
    %1458 = vdwg.mxu0
    %1459 = vmatpush.bf16.msra.mxu0 %v1081
    %1460 = vmatpush.bf16.msra.mxu0 %v1073
    %1461 = vmatpush.bf16.msra.mxu0 %v1065
    %1462 = vmatpush.bf16.msra.mxu0 %v1057
    %1463 = vmatpush.bf16.msra.mxu0 %v1049
    %1464 = vmatpush.bf16.msra.mxu0 %v1041
    %1465 = vmatpush.bf16.msra.mxu0 %v1033
    %1466 = vmatpush.bf16.msra.mxu0 %v1025
    %1467 = vmatmul.bf16.gmra.mxu0 %v106
    %v1468 = vpop.f32.mrf.mxu0
    %v1469 = vadd.f32 %v1456, %v1468
    %v1470 = vpop.f32.mrf.mxu0
    %1471 = vdwg.mxu0
    %1472 = vmatpush.bf16.msra.mxu0 %v954
    %1473 = vmatpush.bf16.msra.mxu0 %v946
    %1474 = vmatpush.bf16.msra.mxu0 %v938
    %1475 = vmatpush.bf16.msra.mxu0 %v930
    %1476 = vmatpush.bf16.msra.mxu0 %v922
    %1477 = vmatpush.bf16.msra.mxu0 %v914
    %1478 = vmatpush.bf16.msra.mxu0 %v906
    %1479 = vmatpush.bf16.msra.mxu0 %v898
    %1480 = vmatmul.bf16.gmra.mxu0 %v104
    %v1481 = vpop.f32.mrf.mxu0
    %v1482 = vadd.f32 %v306, %v1481
    %v1483 = vpop.f32.mrf.mxu0
    %1484 = vdwg.mxu0
    %1485 = vmatpush.bf16.msra.mxu0 %v1018
    %1486 = vmatpush.bf16.msra.mxu0 %v1010
    %1487 = vmatpush.bf16.msra.mxu0 %v1002
    %1488 = vmatpush.bf16.msra.mxu0 %v994
    %1489 = vmatpush.bf16.msra.mxu0 %v986
    %1490 = vmatpush.bf16.msra.mxu0 %v978
    %1491 = vmatpush.bf16.msra.mxu0 %v970
    %1492 = vmatpush.bf16.msra.mxu0 %v962
    %1493 = vmatmul.bf16.gmra.mxu0 %v105
    %v1494 = vpop.f32.mrf.mxu0
    %v1495 = vadd.f32 %v1482, %v1494
    %v1496 = vpop.f32.mrf.mxu0
    %1497 = vdwg.mxu0
    %1498 = vmatpush.bf16.msra.mxu0 %v1082
    %1499 = vmatpush.bf16.msra.mxu0 %v1074
    %1500 = vmatpush.bf16.msra.mxu0 %v1066
    %1501 = vmatpush.bf16.msra.mxu0 %v1058
    %1502 = vmatpush.bf16.msra.mxu0 %v1050
    %1503 = vmatpush.bf16.msra.mxu0 %v1042
    %1504 = vmatpush.bf16.msra.mxu0 %v1034
    %1505 = vmatpush.bf16.msra.mxu0 %v1026
    %1506 = vmatmul.bf16.gmra.mxu0 %v106
    %v1507 = vpop.f32.mrf.mxu0
    %v1508 = vadd.f32 %v1495, %v1507
    %v1509 = vpop.f32.mrf.mxu0
    %1510 = vdwg.mxu0
    %1511 = vmatpush.bf16.msra.mxu0 %v955
    %1512 = vmatpush.bf16.msra.mxu0 %v947
    %1513 = vmatpush.bf16.msra.mxu0 %v939
    %1514 = vmatpush.bf16.msra.mxu0 %v931
    %1515 = vmatpush.bf16.msra.mxu0 %v923
    %1516 = vmatpush.bf16.msra.mxu0 %v915
    %1517 = vmatpush.bf16.msra.mxu0 %v907
    %1518 = vmatpush.bf16.msra.mxu0 %v899
    %1519 = vmatmul.bf16.gmra.mxu0 %v104
    %v1520 = vpop.f32.mrf.mxu0
    %v1521 = vadd.f32 %v307, %v1520
    %v1522 = vpop.f32.mrf.mxu0
    %1523 = vdwg.mxu0
    %1524 = vmatpush.bf16.msra.mxu0 %v1019
    %1525 = vmatpush.bf16.msra.mxu0 %v1011
    %1526 = vmatpush.bf16.msra.mxu0 %v1003
    %1527 = vmatpush.bf16.msra.mxu0 %v995
    %1528 = vmatpush.bf16.msra.mxu0 %v987
    %1529 = vmatpush.bf16.msra.mxu0 %v979
    %1530 = vmatpush.bf16.msra.mxu0 %v971
    %1531 = vmatpush.bf16.msra.mxu0 %v963
    %1532 = vmatmul.bf16.gmra.mxu0 %v105
    %v1533 = vpop.f32.mrf.mxu0
    %v1534 = vadd.f32 %v1521, %v1533
    %v1535 = vpop.f32.mrf.mxu0
    %1536 = vdwg.mxu0
    %1537 = vmatpush.bf16.msra.mxu0 %v1083
    %1538 = vmatpush.bf16.msra.mxu0 %v1075
    %1539 = vmatpush.bf16.msra.mxu0 %v1067
    %1540 = vmatpush.bf16.msra.mxu0 %v1059
    %1541 = vmatpush.bf16.msra.mxu0 %v1051
    %1542 = vmatpush.bf16.msra.mxu0 %v1043
    %1543 = vmatpush.bf16.msra.mxu0 %v1035
    %1544 = vmatpush.bf16.msra.mxu0 %v1027
    %1545 = vmatmul.bf16.gmra.mxu0 %v106
    %v1546 = vpop.f32.mrf.mxu0
    %v1547 = vadd.f32 %v1534, %v1546
    %v1548 = vpop.f32.mrf.mxu0
    %1549 = vdwg.mxu0
    %1550 = vmatpush.bf16.msra.mxu0 %v956
    %1551 = vmatpush.bf16.msra.mxu0 %v948
    %1552 = vmatpush.bf16.msra.mxu0 %v940
    %1553 = vmatpush.bf16.msra.mxu0 %v932
    %1554 = vmatpush.bf16.msra.mxu0 %v924
    %1555 = vmatpush.bf16.msra.mxu0 %v916
    %1556 = vmatpush.bf16.msra.mxu0 %v908
    %1557 = vmatpush.bf16.msra.mxu0 %v900
    %1558 = vmatmul.bf16.gmra.mxu0 %v104
    %v1559 = vpop.f32.mrf.mxu0
    %v1560 = vadd.f32 %v308, %v1559
    %v1561 = vpop.f32.mrf.mxu0
    %1562 = vdwg.mxu0
    %1563 = vmatpush.bf16.msra.mxu0 %v1020
    %1564 = vmatpush.bf16.msra.mxu0 %v1012
    %1565 = vmatpush.bf16.msra.mxu0 %v1004
    %1566 = vmatpush.bf16.msra.mxu0 %v996
    %1567 = vmatpush.bf16.msra.mxu0 %v988
    %1568 = vmatpush.bf16.msra.mxu0 %v980
    %1569 = vmatpush.bf16.msra.mxu0 %v972
    %1570 = vmatpush.bf16.msra.mxu0 %v964
    %1571 = vmatmul.bf16.gmra.mxu0 %v105
    %v1572 = vpop.f32.mrf.mxu0
    %v1573 = vadd.f32 %v1560, %v1572
    %v1574 = vpop.f32.mrf.mxu0
    %1575 = vdwg.mxu0
    %1576 = vmatpush.bf16.msra.mxu0 %v1084
    %1577 = vmatpush.bf16.msra.mxu0 %v1076
    %1578 = vmatpush.bf16.msra.mxu0 %v1068
    %1579 = vmatpush.bf16.msra.mxu0 %v1060
    %1580 = vmatpush.bf16.msra.mxu0 %v1052
    %1581 = vmatpush.bf16.msra.mxu0 %v1044
    %1582 = vmatpush.bf16.msra.mxu0 %v1036
    %1583 = vmatpush.bf16.msra.mxu0 %v1028
    %1584 = vmatmul.bf16.gmra.mxu0 %v106
    %v1585 = vpop.f32.mrf.mxu0
    %v1586 = vadd.f32 %v1573, %v1585
    %v1587 = vpop.f32.mrf.mxu0
    %1588 = vdwg.mxu0
    %v1589 = vmax.f32 %v1313, 0.0
    %v1590 = vmax.f32 %v1352, 0.0
    %v1591 = vmax.f32 %v1391, 0.0
    %v1592 = vmax.f32 %v1430, 0.0
    %v1593 = vmax.f32 %v1469, 0.0
    %v1594 = vmax.f32 %v1508, 0.0
    %v1595 = vmax.f32 %v1547, 0.0
    %v1596 = vmax.f32 %v1586, 0.0
    %v1597 = vpack.c.bf16 %v1589, %v1589
    %v1598 = vpack.c.bf16 %v1590, %v1590
    %v1599 = vpack.c.bf16 %v1591, %v1591
    %v1600 = vpack.c.bf16 %v1592, %v1592
    %v1601 = vpack.c.bf16 %v1593, %v1593
    %v1602 = vpack.c.bf16 %v1594, %v1594
    %v1603 = vpack.c.bf16 %v1595, %v1595
    %v1604 = vpack.c.bf16 %v1596, %v1596
    %v1605 = vld [vmem:[#allocation8] sm:$0xff]
    %v1606 = vld [vmem:[#allocation8 + $0x8] sm:$0xff]
    %v1607 = vld [vmem:[#allocation8 + $0x10] sm:$0xff]
    %v1608 = vld [vmem:[#allocation8 + $0x18] sm:$0xff]
    %v1609 = vld [vmem:[#allocation8 + $0x20] sm:$0xff]
    %v1610 = vld [vmem:[#allocation8 + $0x28] sm:$0xff]
    %v1611 = vld [vmem:[#allocation8 + $0x30] sm:$0xff]
    %v1612 = vld [vmem:[#allocation8 + $0x38] sm:$0xff]
    %v1613 = vld [vmem:[#allocation8 + $0x40] sm:$0xff]
    %v1614 = vld [vmem:[#allocation8 + $0x48] sm:$0xff]
    %v1615 = vld [vmem:[#allocation8 + $0x50] sm:$0xff]
    %v1616 = vld [vmem:[#allocation8 + $0x58] sm:$0xff]
    %v1617 = vld [vmem:[#allocation8 + $0x60] sm:$0xff]
    %v1618 = vld [vmem:[#allocation8 + $0x68] sm:$0xff]
    %v1619 = vld [vmem:[#allocation8 + $0x70] sm:$0xff]
    %v1620 = vld [vmem:[#allocation8 + $0x78] sm:$0xff]
    %v1621 = vld [vmem:[#allocation8 + $0x80] sm:$0xff]
    %v1622 = vld [vmem:[#allocation8 + $0x88] sm:$0xff]
    %v1623 = vld [vmem:[#allocation8 + $0x90] sm:$0xff]
    %v1624 = vld [vmem:[#allocation8 + $0x98] sm:$0xff]
    %v1625 = vld [vmem:[#allocation8 + $0xa0] sm:$0xff]
    %v1626 = vld [vmem:[#allocation8 + $0xa8] sm:$0xff]
    %v1627 = vld [vmem:[#allocation8 + $0xb0] sm:$0xff]
    %v1628 = vld [vmem:[#allocation8 + $0xb8] sm:$0xff]
    %v1629 = vld [vmem:[#allocation8 + $0xc0] sm:$0xff]
    %v1630 = vld [vmem:[#allocation8 + $0xc8] sm:$0xff]
    %v1631 = vld [vmem:[#allocation8 + $0xd0] sm:$0xff]
    %v1632 = vld [vmem:[#allocation8 + $0xd8] sm:$0xff]
    %v1633 = vld [vmem:[#allocation8 + $0xe0] sm:$0xff]
    %v1634 = vld [vmem:[#allocation8 + $0xe8] sm:$0xff]
    %v1635 = vld [vmem:[#allocation8 + $0xf0] sm:$0xff]
    %v1636 = vld [vmem:[#allocation8 + $0xf8] sm:$0xff]
    %v1637 = vld [vmem:[#allocation8 + $0x100] sm:$0xff]
    %v1638 = vld [vmem:[#allocation8 + $0x108] sm:$0xff]
    %v1639 = vld [vmem:[#allocation8 + $0x110] sm:$0xff]
    %v1640 = vld [vmem:[#allocation8 + $0x118] sm:$0xff]
    %v1641 = vld [vmem:[#allocation8 + $0x120] sm:$0xff]
    %v1642 = vld [vmem:[#allocation8 + $0x128] sm:$0xff]
    %v1643 = vld [vmem:[#allocation8 + $0x130] sm:$0xff]
    %v1644 = vld [vmem:[#allocation8 + $0x138] sm:$0xff]
    %v1645 = vld [vmem:[#allocation8 + $0x140] sm:$0xff]
    %v1646 = vld [vmem:[#allocation8 + $0x148] sm:$0xff]
    %v1647 = vld [vmem:[#allocation8 + $0x150] sm:$0xff]
    %v1648 = vld [vmem:[#allocation8 + $0x158] sm:$0xff]
    %v1649 = vld [vmem:[#allocation8 + $0x160] sm:$0xff]
    %v1650 = vld [vmem:[#allocation8 + $0x168] sm:$0xff]
    %v1651 = vld [vmem:[#allocation8 + $0x170] sm:$0xff]
    %v1652 = vld [vmem:[#allocation8 + $0x178] sm:$0xff]
    %v1653 = vld [vmem:[#allocation8 + $0x180] sm:$0xff]
    %v1654 = vld [vmem:[#allocation8 + $0x188] sm:$0xff]
    %v1655 = vld [vmem:[#allocation8 + $0x190] sm:$0xff]
    %v1656 = vld [vmem:[#allocation8 + $0x198] sm:$0xff]
    %v1657 = vld [vmem:[#allocation8 + $0x1a0] sm:$0xff]
    %v1658 = vld [vmem:[#allocation8 + $0x1a8] sm:$0xff]
    %v1659 = vld [vmem:[#allocation8 + $0x1b0] sm:$0xff]
    %v1660 = vld [vmem:[#allocation8 + $0x1b8] sm:$0xff]
    %v1661 = vld [vmem:[#allocation8 + $0x1c0] sm:$0xff]
    %v1662 = vld [vmem:[#allocation8 + $0x1c8] sm:$0xff]
    %v1663 = vld [vmem:[#allocation8 + $0x1d0] sm:$0xff]
    %v1664 = vld [vmem:[#allocation8 + $0x1d8] sm:$0xff]
    %v1665 = vld [vmem:[#allocation8 + $0x1e0] sm:$0xff]
    %v1666 = vld [vmem:[#allocation8 + $0x1e8] sm:$0xff]
    %v1667 = vld [vmem:[#allocation8 + $0x1f0] sm:$0xff]
    %v1668 = vld [vmem:[#allocation8 + $0x1f8] sm:$0xff]
    %v1669 = vld [vmem:[#allocation8 + $0x200] sm:$0xff]
    %v1670 = vld [vmem:[#allocation8 + $0x208] sm:$0xff]
    %v1671 = vld [vmem:[#allocation8 + $0x210] sm:$0xff]
    %v1672 = vld [vmem:[#allocation8 + $0x218] sm:$0xff]
    %v1673 = vld [vmem:[#allocation8 + $0x220] sm:$0xff]
    %v1674 = vld [vmem:[#allocation8 + $0x228] sm:$0xff]
    %v1675 = vld [vmem:[#allocation8 + $0x230] sm:$0xff]
    %v1676 = vld [vmem:[#allocation8 + $0x238] sm:$0xff]
    %v1677 = vld [vmem:[#allocation8 + $0x240] sm:$0xff]
    %v1678 = vld [vmem:[#allocation8 + $0x248] sm:$0xff]
    %v1679 = vld [vmem:[#allocation8 + $0x250] sm:$0xff]
    %v1680 = vld [vmem:[#allocation8 + $0x258] sm:$0xff]
    %v1681 = vld [vmem:[#allocation8 + $0x260] sm:$0xff]
    %v1682 = vld [vmem:[#allocation8 + $0x268] sm:$0xff]
    %v1683 = vld [vmem:[#allocation8 + $0x270] sm:$0xff]
    %v1684 = vld [vmem:[#allocation8 + $0x278] sm:$0xff]
    %v1685 = vld [vmem:[#allocation8 + $0x280] sm:$0xff]
    %v1686 = vld [vmem:[#allocation8 + $0x288] sm:$0xff]
    %v1687 = vld [vmem:[#allocation8 + $0x290] sm:$0xff]
    %v1688 = vld [vmem:[#allocation8 + $0x298] sm:$0xff]
    %v1689 = vld [vmem:[#allocation8 + $0x2a0] sm:$0xff]
    %v1690 = vld [vmem:[#allocation8 + $0x2a8] sm:$0xff]
    %v1691 = vld [vmem:[#allocation8 + $0x2b0] sm:$0xff]
    %v1692 = vld [vmem:[#allocation8 + $0x2b8] sm:$0xff]
    %v1693 = vld [vmem:[#allocation8 + $0x2c0] sm:$0xff]
    %v1694 = vld [vmem:[#allocation8 + $0x2c8] sm:$0xff]
    %v1695 = vld [vmem:[#allocation8 + $0x2d0] sm:$0xff]
    %v1696 = vld [vmem:[#allocation8 + $0x2d8] sm:$0xff]
    %v1697 = vld [vmem:[#allocation8 + $0x2e0] sm:$0xff]
    %v1698 = vld [vmem:[#allocation8 + $0x2e8] sm:$0xff]
    %v1699 = vld [vmem:[#allocation8 + $0x2f0] sm:$0xff]
    %v1700 = vld [vmem:[#allocation8 + $0x2f8] sm:$0xff]
    %v1701 = vld [vmem:[#allocation8 + $0x300] sm:$0xff]
    %v1702 = vld [vmem:[#allocation8 + $0x308] sm:$0xff]
    %v1703 = vld [vmem:[#allocation8 + $0x310] sm:$0xff]
    %v1704 = vld [vmem:[#allocation8 + $0x318] sm:$0xff]
    %v1705 = vld [vmem:[#allocation8 + $0x320] sm:$0xff]
    %v1706 = vld [vmem:[#allocation8 + $0x328] sm:$0xff]
    %v1707 = vld [vmem:[#allocation8 + $0x330] sm:$0xff]
    %v1708 = vld [vmem:[#allocation8 + $0x338] sm:$0xff]
    %v1709 = vld [vmem:[#allocation8 + $0x340] sm:$0xff]
    %v1710 = vld [vmem:[#allocation8 + $0x348] sm:$0xff]
    %v1711 = vld [vmem:[#allocation8 + $0x350] sm:$0xff]
    %v1712 = vld [vmem:[#allocation8 + $0x358] sm:$0xff]
    %v1713 = vld [vmem:[#allocation8 + $0x360] sm:$0xff]
    %v1714 = vld [vmem:[#allocation8 + $0x368] sm:$0xff]
    %v1715 = vld [vmem:[#allocation8 + $0x370] sm:$0xff]
    %v1716 = vld [vmem:[#allocation8 + $0x378] sm:$0xff]
    %v1717 = vld [vmem:[#allocation8 + $0x380] sm:$0xff]
    %v1718 = vld [vmem:[#allocation8 + $0x388] sm:$0xff]
    %v1719 = vld [vmem:[#allocation8 + $0x390] sm:$0xff]
    %v1720 = vld [vmem:[#allocation8 + $0x398] sm:$0xff]
    %v1721 = vld [vmem:[#allocation8 + $0x3a0] sm:$0xff]
    %v1722 = vld [vmem:[#allocation8 + $0x3a8] sm:$0xff]
    %v1723 = vld [vmem:[#allocation8 + $0x3b0] sm:$0xff]
    %v1724 = vld [vmem:[#allocation8 + $0x3b8] sm:$0xff]
    %v1725 = vld [vmem:[#allocation8 + $0x3c0] sm:$0xff]
    %v1726 = vld [vmem:[#allocation8 + $0x3c8] sm:$0xff]
    %v1727 = vld [vmem:[#allocation8 + $0x3d0] sm:$0xff]
    %v1728 = vld [vmem:[#allocation8 + $0x3d8] sm:$0xff]
    %v1729 = vld [vmem:[#allocation8 + $0x3e0] sm:$0xff]
    %v1730 = vld [vmem:[#allocation8 + $0x3e8] sm:$0xff]
    %v1731 = vld [vmem:[#allocation8 + $0x3f0] sm:$0xff]
    %v1732 = vld [vmem:[#allocation8 + $0x3f8] sm:$0xff]
    %v1733 = vld [vmem:[%s4] sm:$0x3]
    %v1735 = vperm.slane %v1733, 0
    %v1736 = vperm.slane %v1733, 1
    %v1867 = vunpack.c.l.b16 %v1605
    %v1868 = vunpack.c.h.b16 %v1605
    %v1869 = vunpack.c.l.b16 %v1606
    %v1870 = vunpack.c.h.b16 %v1606
    %v1871 = vunpack.c.l.b16 %v1607
    %v1872 = vunpack.c.h.b16 %v1607
    %v1873 = vunpack.c.l.b16 %v1608
    %v1874 = vunpack.c.h.b16 %v1608
    %v1875 = vunpack.c.l.b16 %v1609
    %v1876 = vunpack.c.h.b16 %v1609
    %v1877 = vunpack.c.l.b16 %v1610
    %v1878 = vunpack.c.h.b16 %v1610
    %v1879 = vunpack.c.l.b16 %v1611
    %v1880 = vunpack.c.h.b16 %v1611
    %v1881 = vunpack.c.l.b16 %v1612
    %v1882 = vunpack.c.h.b16 %v1612
    %v1883 = vunpack.c.l.b16 %v1613
    %v1884 = vunpack.c.h.b16 %v1613
    %v1885 = vunpack.c.l.b16 %v1614
    %v1886 = vunpack.c.h.b16 %v1614
    %v1887 = vunpack.c.l.b16 %v1615
    %v1888 = vunpack.c.h.b16 %v1615
    %v1889 = vunpack.c.l.b16 %v1616
    %v1890 = vunpack.c.h.b16 %v1616
    %v1891 = vunpack.c.l.b16 %v1617
    %v1892 = vunpack.c.h.b16 %v1617
    %v1893 = vunpack.c.l.b16 %v1618
    %v1894 = vunpack.c.h.b16 %v1618
    %v1895 = vunpack.c.l.b16 %v1619
    %v1896 = vunpack.c.h.b16 %v1619
    %v1897 = vunpack.c.l.b16 %v1620
    %v1898 = vunpack.c.h.b16 %v1620
    %v1899 = vunpack.c.l.b16 %v1621
    %v1900 = vunpack.c.h.b16 %v1621
    %v1901 = vunpack.c.l.b16 %v1622
    %v1902 = vunpack.c.h.b16 %v1622
    %v1903 = vunpack.c.l.b16 %v1623
    %v1904 = vunpack.c.h.b16 %v1623
    %v1905 = vunpack.c.l.b16 %v1624
    %v1906 = vunpack.c.h.b16 %v1624
    %v1907 = vunpack.c.l.b16 %v1625
    %v1908 = vunpack.c.h.b16 %v1625
    %v1909 = vunpack.c.l.b16 %v1626
    %v1910 = vunpack.c.h.b16 %v1626
    %v1911 = vunpack.c.l.b16 %v1627
    %v1912 = vunpack.c.h.b16 %v1627
    %v1913 = vunpack.c.l.b16 %v1628
    %v1914 = vunpack.c.h.b16 %v1628
    %v1915 = vunpack.c.l.b16 %v1629
    %v1916 = vunpack.c.h.b16 %v1629
    %v1917 = vunpack.c.l.b16 %v1630
    %v1918 = vunpack.c.h.b16 %v1630
    %v1919 = vunpack.c.l.b16 %v1631
    %v1920 = vunpack.c.h.b16 %v1631
    %v1921 = vunpack.c.l.b16 %v1632
    %v1922 = vunpack.c.h.b16 %v1632
    %v1923 = vunpack.c.l.b16 %v1633
    %v1924 = vunpack.c.h.b16 %v1633
    %v1925 = vunpack.c.l.b16 %v1634
    %v1926 = vunpack.c.h.b16 %v1634
    %v1927 = vunpack.c.l.b16 %v1635
    %v1928 = vunpack.c.h.b16 %v1635
    %v1929 = vunpack.c.l.b16 %v1636
    %v1930 = vunpack.c.h.b16 %v1636
    %v1931 = vunpack.c.l.b16 %v1637
    %v1932 = vunpack.c.h.b16 %v1637
    %v1933 = vunpack.c.l.b16 %v1638
    %v1934 = vunpack.c.h.b16 %v1638
    %v1935 = vunpack.c.l.b16 %v1639
    %v1936 = vunpack.c.h.b16 %v1639
    %v1937 = vunpack.c.l.b16 %v1640
    %v1938 = vunpack.c.h.b16 %v1640
    %v1939 = vunpack.c.l.b16 %v1641
    %v1940 = vunpack.c.h.b16 %v1641
    %v1941 = vunpack.c.l.b16 %v1642
    %v1942 = vunpack.c.h.b16 %v1642
    %v1943 = vunpack.c.l.b16 %v1643
    %v1944 = vunpack.c.h.b16 %v1643
    %v1945 = vunpack.c.l.b16 %v1644
    %v1946 = vunpack.c.h.b16 %v1644
    %v1947 = vunpack.c.l.b16 %v1645
    %v1948 = vunpack.c.h.b16 %v1645
    %v1949 = vunpack.c.l.b16 %v1646
    %v1950 = vunpack.c.h.b16 %v1646
    %v1951 = vunpack.c.l.b16 %v1647
    %v1952 = vunpack.c.h.b16 %v1647
    %v1953 = vunpack.c.l.b16 %v1648
    %v1954 = vunpack.c.h.b16 %v1648
    %v1955 = vunpack.c.l.b16 %v1649
    %v1956 = vunpack.c.h.b16 %v1649
    %v1957 = vunpack.c.l.b16 %v1650
    %v1958 = vunpack.c.h.b16 %v1650
    %v1959 = vunpack.c.l.b16 %v1651
    %v1960 = vunpack.c.h.b16 %v1651
    %v1961 = vunpack.c.l.b16 %v1652
    %v1962 = vunpack.c.h.b16 %v1652
    %v1963 = vunpack.c.l.b16 %v1653
    %v1964 = vunpack.c.h.b16 %v1653
    %v1965 = vunpack.c.l.b16 %v1654
    %v1966 = vunpack.c.h.b16 %v1654
    %v1967 = vunpack.c.l.b16 %v1655
    %v1968 = vunpack.c.h.b16 %v1655
    %v1969 = vunpack.c.l.b16 %v1656
    %v1970 = vunpack.c.h.b16 %v1656
    %v1971 = vunpack.c.l.b16 %v1657
    %v1972 = vunpack.c.h.b16 %v1657
    %v1973 = vunpack.c.l.b16 %v1658
    %v1974 = vunpack.c.h.b16 %v1658
    %v1975 = vunpack.c.l.b16 %v1659
    %v1976 = vunpack.c.h.b16 %v1659
    %v1977 = vunpack.c.l.b16 %v1660
    %v1978 = vunpack.c.h.b16 %v1660
    %v1979 = vunpack.c.l.b16 %v1661
    %v1980 = vunpack.c.h.b16 %v1661
    %v1981 = vunpack.c.l.b16 %v1662
    %v1982 = vunpack.c.h.b16 %v1662
    %v1983 = vunpack.c.l.b16 %v1663
    %v1984 = vunpack.c.h.b16 %v1663
    %v1985 = vunpack.c.l.b16 %v1664
    %v1986 = vunpack.c.h.b16 %v1664
    %v1987 = vunpack.c.l.b16 %v1665
    %v1988 = vunpack.c.h.b16 %v1665
    %v1989 = vunpack.c.l.b16 %v1666
    %v1990 = vunpack.c.h.b16 %v1666
    %v1991 = vunpack.c.l.b16 %v1667
    %v1992 = vunpack.c.h.b16 %v1667
    %v1993 = vunpack.c.l.b16 %v1668
    %v1994 = vunpack.c.h.b16 %v1668
    %v1995 = vunpack.c.l.b16 %v1669
    %v1996 = vunpack.c.h.b16 %v1669
    %v1997 = vunpack.c.l.b16 %v1670
    %v1998 = vunpack.c.h.b16 %v1670
    %v1999 = vunpack.c.l.b16 %v1671
    %v2000 = vunpack.c.h.b16 %v1671
    %v2001 = vunpack.c.l.b16 %v1672
    %v2002 = vunpack.c.h.b16 %v1672
    %v2003 = vunpack.c.l.b16 %v1673
    %v2004 = vunpack.c.h.b16 %v1673
    %v2005 = vunpack.c.l.b16 %v1674
    %v2006 = vunpack.c.h.b16 %v1674
    %v2007 = vunpack.c.l.b16 %v1675
    %v2008 = vunpack.c.h.b16 %v1675
    %v2009 = vunpack.c.l.b16 %v1676
    %v2010 = vunpack.c.h.b16 %v1676
    %v2011 = vunpack.c.l.b16 %v1677
    %v2012 = vunpack.c.h.b16 %v1677
    %v2013 = vunpack.c.l.b16 %v1678
    %v2014 = vunpack.c.h.b16 %v1678
    %v2015 = vunpack.c.l.b16 %v1679
    %v2016 = vunpack.c.h.b16 %v1679
    %v2017 = vunpack.c.l.b16 %v1680
    %v2018 = vunpack.c.h.b16 %v1680
    %v2019 = vunpack.c.l.b16 %v1681
    %v2020 = vunpack.c.h.b16 %v1681
    %v2021 = vunpack.c.l.b16 %v1682
    %v2022 = vunpack.c.h.b16 %v1682
    %v2023 = vunpack.c.l.b16 %v1683
    %v2024 = vunpack.c.h.b16 %v1683
    %v2025 = vunpack.c.l.b16 %v1684
    %v2026 = vunpack.c.h.b16 %v1684
    %v2027 = vunpack.c.l.b16 %v1685
    %v2028 = vunpack.c.h.b16 %v1685
    %v2029 = vunpack.c.l.b16 %v1686
    %v2030 = vunpack.c.h.b16 %v1686
    %v2031 = vunpack.c.l.b16 %v1687
    %v2032 = vunpack.c.h.b16 %v1687
    %v2033 = vunpack.c.l.b16 %v1688
    %v2034 = vunpack.c.h.b16 %v1688
    %v2035 = vunpack.c.l.b16 %v1689
    %v2036 = vunpack.c.h.b16 %v1689
    %v2037 = vunpack.c.l.b16 %v1690
    %v2038 = vunpack.c.h.b16 %v1690
    %v2039 = vunpack.c.l.b16 %v1691
    %v2040 = vunpack.c.h.b16 %v1691
    %v2041 = vunpack.c.l.b16 %v1692
    %v2042 = vunpack.c.h.b16 %v1692
    %v2043 = vunpack.c.l.b16 %v1693
    %v2044 = vunpack.c.h.b16 %v1693
    %v2045 = vunpack.c.l.b16 %v1694
    %v2046 = vunpack.c.h.b16 %v1694
    %v2047 = vunpack.c.l.b16 %v1695
    %v2048 = vunpack.c.h.b16 %v1695
    %v2049 = vunpack.c.l.b16 %v1696
    %v2050 = vunpack.c.h.b16 %v1696
    %v2051 = vunpack.c.l.b16 %v1697
    %v2052 = vunpack.c.h.b16 %v1697
    %v2053 = vunpack.c.l.b16 %v1698
    %v2054 = vunpack.c.h.b16 %v1698
    %v2055 = vunpack.c.l.b16 %v1699
    %v2056 = vunpack.c.h.b16 %v1699
    %v2057 = vunpack.c.l.b16 %v1700
    %v2058 = vunpack.c.h.b16 %v1700
    %v2059 = vunpack.c.l.b16 %v1701
    %v2060 = vunpack.c.h.b16 %v1701
    %v2061 = vunpack.c.l.b16 %v1702
    %v2062 = vunpack.c.h.b16 %v1702
    %v2063 = vunpack.c.l.b16 %v1703
    %v2064 = vunpack.c.h.b16 %v1703
    %v2065 = vunpack.c.l.b16 %v1704
    %v2066 = vunpack.c.h.b16 %v1704
    %v2067 = vunpack.c.l.b16 %v1705
    %v2068 = vunpack.c.h.b16 %v1705
    %v2069 = vunpack.c.l.b16 %v1706
    %v2070 = vunpack.c.h.b16 %v1706
    %v2071 = vunpack.c.l.b16 %v1707
    %v2072 = vunpack.c.h.b16 %v1707
    %v2073 = vunpack.c.l.b16 %v1708
    %v2074 = vunpack.c.h.b16 %v1708
    %v2075 = vunpack.c.l.b16 %v1709
    %v2076 = vunpack.c.h.b16 %v1709
    %v2077 = vunpack.c.l.b16 %v1710
    %v2078 = vunpack.c.h.b16 %v1710
    %v2079 = vunpack.c.l.b16 %v1711
    %v2080 = vunpack.c.h.b16 %v1711
    %v2081 = vunpack.c.l.b16 %v1712
    %v2082 = vunpack.c.h.b16 %v1712
    %v2083 = vunpack.c.l.b16 %v1713
    %v2084 = vunpack.c.h.b16 %v1713
    %v2085 = vunpack.c.l.b16 %v1714
    %v2086 = vunpack.c.h.b16 %v1714
    %v2087 = vunpack.c.l.b16 %v1715
    %v2088 = vunpack.c.h.b16 %v1715
    %v2089 = vunpack.c.l.b16 %v1716
    %v2090 = vunpack.c.h.b16 %v1716
    %v2091 = vunpack.c.l.b16 %v1717
    %v2092 = vunpack.c.h.b16 %v1717
    %v2093 = vunpack.c.l.b16 %v1718
    %v2094 = vunpack.c.h.b16 %v1718
    %v2095 = vunpack.c.l.b16 %v1719
    %v2096 = vunpack.c.h.b16 %v1719
    %v2097 = vunpack.c.l.b16 %v1720
    %v2098 = vunpack.c.h.b16 %v1720
    %v2099 = vunpack.c.l.b16 %v1721
    %v2100 = vunpack.c.h.b16 %v1721
    %v2101 = vunpack.c.l.b16 %v1722
    %v2102 = vunpack.c.h.b16 %v1722
    %v2103 = vunpack.c.l.b16 %v1723
    %v2104 = vunpack.c.h.b16 %v1723
    %v2105 = vunpack.c.l.b16 %v1724
    %v2106 = vunpack.c.h.b16 %v1724
    %v2107 = vunpack.c.l.b16 %v1725
    %v2108 = vunpack.c.h.b16 %v1725
    %v2109 = vunpack.c.l.b16 %v1726
    %v2110 = vunpack.c.h.b16 %v1726
    %v2111 = vunpack.c.l.b16 %v1727
    %v2112 = vunpack.c.h.b16 %v1727
    %v2113 = vunpack.c.l.b16 %v1728
    %v2114 = vunpack.c.h.b16 %v1728
    %v2115 = vunpack.c.l.b16 %v1729
    %v2116 = vunpack.c.h.b16 %v1729
    %v2117 = vunpack.c.l.b16 %v1730
    %v2118 = vunpack.c.h.b16 %v1730
    %v2119 = vunpack.c.l.b16 %v1731
    %v2120 = vunpack.c.h.b16 %v1731
    %v2121 = vunpack.c.l.b16 %v1732
    %v2122 = vunpack.c.h.b16 %v1732
    %v2123 = vpack.c.b16 %v1869, %v1867
    %v2124 = vpack.c.b16 %v1870, %v1868
    %v2125 = vpack.c.b16 %v1873, %v1871
    %v2126 = vpack.c.b16 %v1874, %v1872
    %v2127 = vpack.c.b16 %v1877, %v1875
    %v2128 = vpack.c.b16 %v1878, %v1876
    %v2129 = vpack.c.b16 %v1881, %v1879
    %v2130 = vpack.c.b16 %v1882, %v1880
    %v2131 = vpack.c.b16 %v1885, %v1883
    %v2132 = vpack.c.b16 %v1886, %v1884
    %v2133 = vpack.c.b16 %v1889, %v1887
    %v2134 = vpack.c.b16 %v1890, %v1888
    %v2135 = vpack.c.b16 %v1893, %v1891
    %v2136 = vpack.c.b16 %v1894, %v1892
    %v2137 = vpack.c.b16 %v1897, %v1895
    %v2138 = vpack.c.b16 %v1898, %v1896
    %v2139 = vpack.c.b16 %v1901, %v1899
    %v2140 = vpack.c.b16 %v1902, %v1900
    %v2141 = vpack.c.b16 %v1905, %v1903
    %v2142 = vpack.c.b16 %v1906, %v1904
    %v2143 = vpack.c.b16 %v1909, %v1907
    %v2144 = vpack.c.b16 %v1910, %v1908
    %v2145 = vpack.c.b16 %v1913, %v1911
    %v2146 = vpack.c.b16 %v1914, %v1912
    %v2147 = vpack.c.b16 %v1917, %v1915
    %v2148 = vpack.c.b16 %v1918, %v1916
    %v2149 = vpack.c.b16 %v1921, %v1919
    %v2150 = vpack.c.b16 %v1922, %v1920
    %v2151 = vpack.c.b16 %v1925, %v1923
    %v2152 = vpack.c.b16 %v1926, %v1924
    %v2153 = vpack.c.b16 %v1929, %v1927
    %v2154 = vpack.c.b16 %v1930, %v1928
    %v2155 = vpack.c.b16 %v1933, %v1931
    %v2156 = vpack.c.b16 %v1934, %v1932
    %v2157 = vpack.c.b16 %v1937, %v1935
    %v2158 = vpack.c.b16 %v1938, %v1936
    %v2159 = vpack.c.b16 %v1941, %v1939
    %v2160 = vpack.c.b16 %v1942, %v1940
    %v2161 = vpack.c.b16 %v1945, %v1943
    %v2162 = vpack.c.b16 %v1946, %v1944
    %v2163 = vpack.c.b16 %v1949, %v1947
    %v2164 = vpack.c.b16 %v1950, %v1948
    %v2165 = vpack.c.b16 %v1953, %v1951
    %v2166 = vpack.c.b16 %v1954, %v1952
    %v2167 = vpack.c.b16 %v1957, %v1955
    %v2168 = vpack.c.b16 %v1958, %v1956
    %v2169 = vpack.c.b16 %v1961, %v1959
    %v2170 = vpack.c.b16 %v1962, %v1960
    %v2171 = vpack.c.b16 %v1965, %v1963
    %v2172 = vpack.c.b16 %v1966, %v1964
    %v2173 = vpack.c.b16 %v1969, %v1967
    %v2174 = vpack.c.b16 %v1970, %v1968
    %v2175 = vpack.c.b16 %v1973, %v1971
    %v2176 = vpack.c.b16 %v1974, %v1972
    %v2177 = vpack.c.b16 %v1977, %v1975
    %v2178 = vpack.c.b16 %v1978, %v1976
    %v2179 = vpack.c.b16 %v1981, %v1979
    %v2180 = vpack.c.b16 %v1982, %v1980
    %v2181 = vpack.c.b16 %v1985, %v1983
    %v2182 = vpack.c.b16 %v1986, %v1984
    %v2183 = vpack.c.b16 %v1989, %v1987
    %v2184 = vpack.c.b16 %v1990, %v1988
    %v2185 = vpack.c.b16 %v1993, %v1991
    %v2186 = vpack.c.b16 %v1994, %v1992
    %v2187 = vpack.c.b16 %v1997, %v1995
    %v2188 = vpack.c.b16 %v1998, %v1996
    %v2189 = vpack.c.b16 %v2001, %v1999
    %v2190 = vpack.c.b16 %v2002, %v2000
    %v2191 = vpack.c.b16 %v2005, %v2003
    %v2192 = vpack.c.b16 %v2006, %v2004
    %v2193 = vpack.c.b16 %v2009, %v2007
    %v2194 = vpack.c.b16 %v2010, %v2008
    %v2195 = vpack.c.b16 %v2013, %v2011
    %v2196 = vpack.c.b16 %v2014, %v2012
    %v2197 = vpack.c.b16 %v2017, %v2015
    %v2198 = vpack.c.b16 %v2018, %v2016
    %v2199 = vpack.c.b16 %v2021, %v2019
    %v2200 = vpack.c.b16 %v2022, %v2020
    %v2201 = vpack.c.b16 %v2025, %v2023
    %v2202 = vpack.c.b16 %v2026, %v2024
    %v2203 = vpack.c.b16 %v2029, %v2027
    %v2204 = vpack.c.b16 %v2030, %v2028
    %v2205 = vpack.c.b16 %v2033, %v2031
    %v2206 = vpack.c.b16 %v2034, %v2032
    %v2207 = vpack.c.b16 %v2037, %v2035
    %v2208 = vpack.c.b16 %v2038, %v2036
    %v2209 = vpack.c.b16 %v2041, %v2039
    %v2210 = vpack.c.b16 %v2042, %v2040
    %v2211 = vpack.c.b16 %v2045, %v2043
    %v2212 = vpack.c.b16 %v2046, %v2044
    %v2213 = vpack.c.b16 %v2049, %v2047
    %v2214 = vpack.c.b16 %v2050, %v2048
    %v2215 = vpack.c.b16 %v2053, %v2051
    %v2216 = vpack.c.b16 %v2054, %v2052
    %v2217 = vpack.c.b16 %v2057, %v2055
    %v2218 = vpack.c.b16 %v2058, %v2056
    %v2219 = vpack.c.b16 %v2061, %v2059
    %v2220 = vpack.c.b16 %v2062, %v2060
    %v2221 = vpack.c.b16 %v2065, %v2063
    %v2222 = vpack.c.b16 %v2066, %v2064
    %v2223 = vpack.c.b16 %v2069, %v2067
    %v2224 = vpack.c.b16 %v2070, %v2068
    %v2225 = vpack.c.b16 %v2073, %v2071
    %v2226 = vpack.c.b16 %v2074, %v2072
    %v2227 = vpack.c.b16 %v2077, %v2075
    %v2228 = vpack.c.b16 %v2078, %v2076
    %v2229 = vpack.c.b16 %v2081, %v2079
    %v2230 = vpack.c.b16 %v2082, %v2080
    %v2231 = vpack.c.b16 %v2085, %v2083
    %v2232 = vpack.c.b16 %v2086, %v2084
    %v2233 = vpack.c.b16 %v2089, %v2087
    %v2234 = vpack.c.b16 %v2090, %v2088
    %v2235 = vpack.c.b16 %v2093, %v2091
    %v2236 = vpack.c.b16 %v2094, %v2092
    %v2237 = vpack.c.b16 %v2097, %v2095
    %v2238 = vpack.c.b16 %v2098, %v2096
    %v2239 = vpack.c.b16 %v2101, %v2099
    %v2240 = vpack.c.b16 %v2102, %v2100
    %v2241 = vpack.c.b16 %v2105, %v2103
    %v2242 = vpack.c.b16 %v2106, %v2104
    %v2243 = vpack.c.b16 %v2109, %v2107
    %v2244 = vpack.c.b16 %v2110, %v2108
    %v2245 = vpack.c.b16 %v2113, %v2111
    %v2246 = vpack.c.b16 %v2114, %v2112
    %v2247 = vpack.c.b16 %v2117, %v2115
    %v2248 = vpack.c.b16 %v2118, %v2116
    %v2249 = vpack.c.b16 %v2121, %v2119
    %v2250 = vpack.c.b16 %v2122, %v2120
    %2379 = vmatpush.bf16.msra.mxu0 %v2137
    %2380 = vmatpush.bf16.msra.mxu0 %v2135
    %2381 = vmatpush.bf16.msra.mxu0 %v2133
    %2382 = vmatpush.bf16.msra.mxu0 %v2131
    %2383 = vmatpush.bf16.msra.mxu0 %v2129
    %2384 = vmatpush.bf16.msra.mxu0 %v2127
    %2385 = vmatpush.bf16.msra.mxu0 %v2125
    %2386 = vmatpush.bf16.msra.mxu0 %v2123
    %2387 = vmatmul.bf16.gmra.mxu0 %v1597
    %v2388 = vpop.f32.mrf.mxu0
    %v2389 = vadd.f32 %v1735, %v2388
    %v2390 = vpop.f32.mrf.mxu0
    %2391 = vdwg.mxu0
    %2392 = vmatpush.bf16.msra.mxu0 %v2153
    %2393 = vmatpush.bf16.msra.mxu0 %v2151
    %2394 = vmatpush.bf16.msra.mxu0 %v2149
    %2395 = vmatpush.bf16.msra.mxu0 %v2147
    %2396 = vmatpush.bf16.msra.mxu0 %v2145
    %2397 = vmatpush.bf16.msra.mxu0 %v2143
    %2398 = vmatpush.bf16.msra.mxu0 %v2141
    %2399 = vmatpush.bf16.msra.mxu0 %v2139
    %2400 = vmatmul.bf16.gmra.mxu0 %v1598
    %v2401 = vpop.f32.mrf.mxu0
    %v2402 = vadd.f32 %v2389, %v2401
    %v2403 = vpop.f32.mrf.mxu0
    %2404 = vdwg.mxu0
    %2405 = vmatpush.bf16.msra.mxu0 %v2169
    %2406 = vmatpush.bf16.msra.mxu0 %v2167
    %2407 = vmatpush.bf16.msra.mxu0 %v2165
    %2408 = vmatpush.bf16.msra.mxu0 %v2163
    %2409 = vmatpush.bf16.msra.mxu0 %v2161
    %2410 = vmatpush.bf16.msra.mxu0 %v2159
    %2411 = vmatpush.bf16.msra.mxu0 %v2157
    %2412 = vmatpush.bf16.msra.mxu0 %v2155
    %2413 = vmatmul.bf16.gmra.mxu0 %v1599
    %v2414 = vpop.f32.mrf.mxu0
    %v2415 = vadd.f32 %v2402, %v2414
    %v2416 = vpop.f32.mrf.mxu0
    %2417 = vdwg.mxu0
    %2418 = vmatpush.bf16.msra.mxu0 %v2185
    %2419 = vmatpush.bf16.msra.mxu0 %v2183
    %2420 = vmatpush.bf16.msra.mxu0 %v2181
    %2421 = vmatpush.bf16.msra.mxu0 %v2179
    %2422 = vmatpush.bf16.msra.mxu0 %v2177
    %2423 = vmatpush.bf16.msra.mxu0 %v2175
    %2424 = vmatpush.bf16.msra.mxu0 %v2173
    %2425 = vmatpush.bf16.msra.mxu0 %v2171
    %2426 = vmatmul.bf16.gmra.mxu0 %v1600
    %v2427 = vpop.f32.mrf.mxu0
    %v2428 = vadd.f32 %v2415, %v2427
    %v2429 = vpop.f32.mrf.mxu0
    %2430 = vdwg.mxu0
    %2431 = vmatpush.bf16.msra.mxu0 %v2201
    %2432 = vmatpush.bf16.msra.mxu0 %v2199
    %2433 = vmatpush.bf16.msra.mxu0 %v2197
    %2434 = vmatpush.bf16.msra.mxu0 %v2195
    %2435 = vmatpush.bf16.msra.mxu0 %v2193
    %2436 = vmatpush.bf16.msra.mxu0 %v2191
    %2437 = vmatpush.bf16.msra.mxu0 %v2189
    %2438 = vmatpush.bf16.msra.mxu0 %v2187
    %2439 = vmatmul.bf16.gmra.mxu0 %v1601
    %v2440 = vpop.f32.mrf.mxu0
    %v2441 = vadd.f32 %v2428, %v2440
    %v2442 = vpop.f32.mrf.mxu0
    %2443 = vdwg.mxu0
    %2444 = vmatpush.bf16.msra.mxu0 %v2217
    %2445 = vmatpush.bf16.msra.mxu0 %v2215
    %2446 = vmatpush.bf16.msra.mxu0 %v2213
    %2447 = vmatpush.bf16.msra.mxu0 %v2211
    %2448 = vmatpush.bf16.msra.mxu0 %v2209
    %2449 = vmatpush.bf16.msra.mxu0 %v2207
    %2450 = vmatpush.bf16.msra.mxu0 %v2205
    %2451 = vmatpush.bf16.msra.mxu0 %v2203
    %2452 = vmatmul.bf16.gmra.mxu0 %v1602
    %v2453 = vpop.f32.mrf.mxu0
    %v2454 = vadd.f32 %v2441, %v2453
    %v2455 = vpop.f32.mrf.mxu0
    %2456 = vdwg.mxu0
    %2457 = vmatpush.bf16.msra.mxu0 %v2233
    %2458 = vmatpush.bf16.msra.mxu0 %v2231
    %2459 = vmatpush.bf16.msra.mxu0 %v2229
    %2460 = vmatpush.bf16.msra.mxu0 %v2227
    %2461 = vmatpush.bf16.msra.mxu0 %v2225
    %2462 = vmatpush.bf16.msra.mxu0 %v2223
    %2463 = vmatpush.bf16.msra.mxu0 %v2221
    %2464 = vmatpush.bf16.msra.mxu0 %v2219
    %2465 = vmatmul.bf16.gmra.mxu0 %v1603
    %v2466 = vpop.f32.mrf.mxu0
    %v2467 = vadd.f32 %v2454, %v2466
    %v2468 = vpop.f32.mrf.mxu0
    %2469 = vdwg.mxu0
    %2470 = vmatpush.bf16.msra.mxu0 %v2249
    %2471 = vmatpush.bf16.msra.mxu0 %v2247
    %2472 = vmatpush.bf16.msra.mxu0 %v2245
    %2473 = vmatpush.bf16.msra.mxu0 %v2243
    %2474 = vmatpush.bf16.msra.mxu0 %v2241
    %2475 = vmatpush.bf16.msra.mxu0 %v2239
    %2476 = vmatpush.bf16.msra.mxu0 %v2237
    %2477 = vmatpush.bf16.msra.mxu0 %v2235
    %2478 = vmatmul.bf16.gmra.mxu0 %v1604
    %v2479 = vpop.f32.mrf.mxu0
    %v2480 = vadd.f32 %v2467, %v2479
    %v2481 = vpop.f32.mrf.mxu0
    %2482 = vdwg.mxu0
    %2483 = vmatpush.bf16.msra.mxu0 %v2138
    %2484 = vmatpush.bf16.msra.mxu0 %v2136
    %2485 = vmatpush.bf16.msra.mxu0 %v2134
    %2486 = vmatpush.bf16.msra.mxu0 %v2132
    %2487 = vmatpush.bf16.msra.mxu0 %v2130
    %2488 = vmatpush.bf16.msra.mxu0 %v2128
    %2489 = vmatpush.bf16.msra.mxu0 %v2126
    %2490 = vmatpush.bf16.msra.mxu0 %v2124
    %2491 = vmatmul.bf16.gmra.mxu0 %v1597
    %v2492 = vpop.f32.mrf.mxu0
    %v2493 = vadd.f32 %v1736, %v2492
    %v2494 = vpop.f32.mrf.mxu0
    %2495 = vdwg.mxu0
    %2496 = vmatpush.bf16.msra.mxu0 %v2154
    %2497 = vmatpush.bf16.msra.mxu0 %v2152
    %2498 = vmatpush.bf16.msra.mxu0 %v2150
    %2499 = vmatpush.bf16.msra.mxu0 %v2148
    %2500 = vmatpush.bf16.msra.mxu0 %v2146
    %2501 = vmatpush.bf16.msra.mxu0 %v2144
    %2502 = vmatpush.bf16.msra.mxu0 %v2142
    %2503 = vmatpush.bf16.msra.mxu0 %v2140
    %2504 = vmatmul.bf16.gmra.mxu0 %v1598
    %v2505 = vpop.f32.mrf.mxu0
    %v2506 = vadd.f32 %v2493, %v2505
    %v2507 = vpop.f32.mrf.mxu0
    %2508 = vdwg.mxu0
    %2509 = vmatpush.bf16.msra.mxu0 %v2170
    %2510 = vmatpush.bf16.msra.mxu0 %v2168
    %2511 = vmatpush.bf16.msra.mxu0 %v2166
    %2512 = vmatpush.bf16.msra.mxu0 %v2164
    %2513 = vmatpush.bf16.msra.mxu0 %v2162
    %2514 = vmatpush.bf16.msra.mxu0 %v2160
    %2515 = vmatpush.bf16.msra.mxu0 %v2158
    %2516 = vmatpush.bf16.msra.mxu0 %v2156
    %2517 = vmatmul.bf16.gmra.mxu0 %v1599
    %v2518 = vpop.f32.mrf.mxu0
    %v2519 = vadd.f32 %v2506, %v2518
    %v2520 = vpop.f32.mrf.mxu0
    %2521 = vdwg.mxu0
    %2522 = vmatpush.bf16.msra.mxu0 %v2186
    %2523 = vmatpush.bf16.msra.mxu0 %v2184
    %2524 = vmatpush.bf16.msra.mxu0 %v2182
    %2525 = vmatpush.bf16.msra.mxu0 %v2180
    %2526 = vmatpush.bf16.msra.mxu0 %v2178
    %2527 = vmatpush.bf16.msra.mxu0 %v2176
    %2528 = vmatpush.bf16.msra.mxu0 %v2174
    %2529 = vmatpush.bf16.msra.mxu0 %v2172
    %2530 = vmatmul.bf16.gmra.mxu0 %v1600
    %v2531 = vpop.f32.mrf.mxu0
    %v2532 = vadd.f32 %v2519, %v2531
    %v2533 = vpop.f32.mrf.mxu0
    %2534 = vdwg.mxu0
    %2535 = vmatpush.bf16.msra.mxu0 %v2202
    %2536 = vmatpush.bf16.msra.mxu0 %v2200
    %2537 = vmatpush.bf16.msra.mxu0 %v2198
    %2538 = vmatpush.bf16.msra.mxu0 %v2196
    %2539 = vmatpush.bf16.msra.mxu0 %v2194
    %2540 = vmatpush.bf16.msra.mxu0 %v2192
    %2541 = vmatpush.bf16.msra.mxu0 %v2190
    %2542 = vmatpush.bf16.msra.mxu0 %v2188
    %2543 = vmatmul.bf16.gmra.mxu0 %v1601
    %v2544 = vpop.f32.mrf.mxu0
    %v2545 = vadd.f32 %v2532, %v2544
    %v2546 = vpop.f32.mrf.mxu0
    %2547 = vdwg.mxu0
    %2548 = vmatpush.bf16.msra.mxu0 %v2218
    %2549 = vmatpush.bf16.msra.mxu0 %v2216
    %2550 = vmatpush.bf16.msra.mxu0 %v2214
    %2551 = vmatpush.bf16.msra.mxu0 %v2212
    %2552 = vmatpush.bf16.msra.mxu0 %v2210
    %2553 = vmatpush.bf16.msra.mxu0 %v2208
    %2554 = vmatpush.bf16.msra.mxu0 %v2206
    %2555 = vmatpush.bf16.msra.mxu0 %v2204
    %2556 = vmatmul.bf16.gmra.mxu0 %v1602
    %v2557 = vpop.f32.mrf.mxu0
    %v2558 = vadd.f32 %v2545, %v2557
    %v2559 = vpop.f32.mrf.mxu0
    %2560 = vdwg.mxu0
    %2561 = vmatpush.bf16.msra.mxu0 %v2234
    %2562 = vmatpush.bf16.msra.mxu0 %v2232
    %2563 = vmatpush.bf16.msra.mxu0 %v2230
    %2564 = vmatpush.bf16.msra.mxu0 %v2228
    %2565 = vmatpush.bf16.msra.mxu0 %v2226
    %2566 = vmatpush.bf16.msra.mxu0 %v2224
    %2567 = vmatpush.bf16.msra.mxu0 %v2222
    %2568 = vmatpush.bf16.msra.mxu0 %v2220
    %2569 = vmatmul.bf16.gmra.mxu0 %v1603
    %v2570 = vpop.f32.mrf.mxu0
    %v2571 = vadd.f32 %v2558, %v2570
    %v2572 = vpop.f32.mrf.mxu0
    %2573 = vdwg.mxu0
    %2574 = vmatpush.bf16.msra.mxu0 %v2250
    %2575 = vmatpush.bf16.msra.mxu0 %v2248
    %2576 = vmatpush.bf16.msra.mxu0 %v2246
    %2577 = vmatpush.bf16.msra.mxu0 %v2244
    %2578 = vmatpush.bf16.msra.mxu0 %v2242
    %2579 = vmatpush.bf16.msra.mxu0 %v2240
    %2580 = vmatpush.bf16.msra.mxu0 %v2238
    %2581 = vmatpush.bf16.msra.mxu0 %v2236
    %2582 = vmatmul.bf16.gmra.mxu0 %v1604
    %v2583 = vpop.f32.mrf.mxu0
    %v2584 = vadd.f32 %v2571, %v2583
    %v2585 = vpop.f32.mrf.mxu0
    %2586 = vdwg.mxu0
    %v2587 = vmax.f32 %v2480, 0.0
    %v2588 = vmax.f32 %v2584, 0.0
    %v2589 = vpack.c.bf16 %v2587, %v2587
    %v2590 = vpack.c.bf16 %v2588, %v2588
    %v2591 = vld [vmem:[#allocation10] sm:$0xf]
    %v2592 = vld [vmem:[#allocation10 + $0x4] sm:$0xf]
    %v2593 = vld [vmem:[#allocation10 + $0x8] sm:$0xf]
    %v2594 = vld [vmem:[#allocation10 + $0xc] sm:$0xf]
    %v2595 = vld [vmem:[#allocation10 + $0x10] sm:$0xf]
    %v2596 = vld [vmem:[#allocation10 + $0x14] sm:$0xf]
    %v2597 = vld [vmem:[#allocation10 + $0x18] sm:$0xf]
    %v2598 = vld [vmem:[#allocation10 + $0x1c] sm:$0xf]
    %v2599 = vld [vmem:[#allocation10 + $0x20] sm:$0xf]
    %v2600 = vld [vmem:[#allocation10 + $0x24] sm:$0xf]
    %v2601 = vld [vmem:[#allocation10 + $0x28] sm:$0xf]
    %v2602 = vld [vmem:[#allocation10 + $0x2c] sm:$0xf]
    %v2603 = vld [vmem:[#allocation10 + $0x30] sm:$0xf]
    %v2604 = vld [vmem:[#allocation10 + $0x34] sm:$0xf]
    %v2605 = vld [vmem:[#allocation10 + $0x38] sm:$0xf]
    %v2606 = vld [vmem:[#allocation10 + $0x3c] sm:$0xf]
    %v2607 = vld [vmem:[#allocation10 + $0x40] sm:$0xf]
    %v2608 = vld [vmem:[#allocation10 + $0x44] sm:$0xf]
    %v2609 = vld [vmem:[#allocation10 + $0x48] sm:$0xf]
    %v2610 = vld [vmem:[#allocation10 + $0x4c] sm:$0xf]
    %v2611 = vld [vmem:[#allocation10 + $0x50] sm:$0xf]
    %v2612 = vld [vmem:[#allocation10 + $0x54] sm:$0xf]
    %v2613 = vld [vmem:[#allocation10 + $0x58] sm:$0xf]
    %v2614 = vld [vmem:[#allocation10 + $0x5c] sm:$0xf]
    %v2615 = vld [vmem:[#allocation10 + $0x60] sm:$0xf]
    %v2616 = vld [vmem:[#allocation10 + $0x64] sm:$0xf]
    %v2617 = vld [vmem:[#allocation10 + $0x68] sm:$0xf]
    %v2618 = vld [vmem:[#allocation10 + $0x6c] sm:$0xf]
    %v2619 = vld [vmem:[#allocation10 + $0x70] sm:$0xf]
    %v2620 = vld [vmem:[#allocation10 + $0x74] sm:$0xf]
    %v2621 = vld [vmem:[#allocation10 + $0x78] sm:$0xf]
    %v2622 = vld [vmem:[#allocation10 + $0x7c] sm:$0xf]
    %v2623 = vld [vmem:[%s6] sm:$0x1]
    %v2625 = vperm.slane %v2623, 0
    %v2659 = vunpack.c.l.b16 %v2591
    %v2660 = vunpack.c.l.b16 %v2592
    %v2661 = vunpack.c.l.b16 %v2593
    %v2662 = vunpack.c.l.b16 %v2594
    %v2663 = vunpack.c.l.b16 %v2595
    %v2664 = vunpack.c.l.b16 %v2596
    %v2665 = vunpack.c.l.b16 %v2597
    %v2666 = vunpack.c.l.b16 %v2598
    %v2667 = vunpack.c.l.b16 %v2599
    %v2668 = vunpack.c.l.b16 %v2600
    %v2669 = vunpack.c.l.b16 %v2601
    %v2670 = vunpack.c.l.b16 %v2602
    %v2671 = vunpack.c.l.b16 %v2603
    %v2672 = vunpack.c.l.b16 %v2604
    %v2673 = vunpack.c.l.b16 %v2605
    %v2674 = vunpack.c.l.b16 %v2606
    %v2675 = vunpack.c.l.b16 %v2607
    %v2676 = vunpack.c.l.b16 %v2608
    %v2677 = vunpack.c.l.b16 %v2609
    %v2678 = vunpack.c.l.b16 %v2610
    %v2679 = vunpack.c.l.b16 %v2611
    %v2680 = vunpack.c.l.b16 %v2612
    %v2681 = vunpack.c.l.b16 %v2613
    %v2682 = vunpack.c.l.b16 %v2614
    %v2683 = vunpack.c.l.b16 %v2615
    %v2684 = vunpack.c.l.b16 %v2616
    %v2685 = vunpack.c.l.b16 %v2617
    %v2686 = vunpack.c.l.b16 %v2618
    %v2687 = vunpack.c.l.b16 %v2619
    %v2688 = vunpack.c.l.b16 %v2620
    %v2689 = vunpack.c.l.b16 %v2621
    %v2690 = vunpack.c.l.b16 %v2622
    %v2691 = vpack.c.b16 %v2660, %v2659
    %v2692 = vpack.c.b16 %v2662, %v2661
    %v2693 = vpack.c.b16 %v2664, %v2663
    %v2694 = vpack.c.b16 %v2666, %v2665
    %v2695 = vpack.c.b16 %v2668, %v2667
    %v2696 = vpack.c.b16 %v2670, %v2669
    %v2697 = vpack.c.b16 %v2672, %v2671
    %v2698 = vpack.c.b16 %v2674, %v2673
    %v2699 = vpack.c.b16 %v2676, %v2675
    %v2700 = vpack.c.b16 %v2678, %v2677
    %v2701 = vpack.c.b16 %v2680, %v2679
    %v2702 = vpack.c.b16 %v2682, %v2681
    %v2703 = vpack.c.b16 %v2684, %v2683
    %v2704 = vpack.c.b16 %v2686, %v2685
    %v2705 = vpack.c.b16 %v2688, %v2687
    %v2706 = vpack.c.b16 %v2690, %v2689
    %2723 = vmatpush.bf16.msra.mxu0 %v2698
    %2724 = vmatpush.bf16.msra.mxu0 %v2697
    %2725 = vmatpush.bf16.msra.mxu0 %v2696
    %2726 = vmatpush.bf16.msra.mxu0 %v2695
    %2727 = vmatpush.bf16.msra.mxu0 %v2694
    %2728 = vmatpush.bf16.msra.mxu0 %v2693
    %2729 = vmatpush.bf16.msra.mxu0 %v2692
    %2730 = vmatpush.bf16.msra.mxu0 %v2691
    %2731 = vmatmul.bf16.gmra.mxu0 %v2589
    %v2732 = vpop.f32.mrf.mxu0
    %v2733 = vadd.f32 %v2625, %v2732
    %v2734 = vpop.f32.mrf.mxu0
    %2735 = vdwg.mxu0
    %2736 = vmatpush.bf16.msra.mxu0 %v2706
    %2737 = vmatpush.bf16.msra.mxu0 %v2705
    %2738 = vmatpush.bf16.msra.mxu0 %v2704
    %2739 = vmatpush.bf16.msra.mxu0 %v2703
    %2740 = vmatpush.bf16.msra.mxu0 %v2702
    %2741 = vmatpush.bf16.msra.mxu0 %v2701
    %2742 = vmatpush.bf16.msra.mxu0 %v2700
    %2743 = vmatpush.bf16.msra.mxu0 %v2699
    %2744 = vmatmul.bf16.gmra.mxu0 %v2590
    %v2745 = vpop.f32.mrf.mxu0
    %v2746 = vadd.f32 %v2733, %v2745
    %v2747 = vpop.f32.mrf.mxu0
    %2748 = vdwg.mxu0
    %2749 = vmax.xlane.f32.xlu0 %v2746
    %v2750 = vpop.xlane.xlu0 %2749
    %v2751 = vsub.f32 %v2746, %v2750
    %v2752 = vmul.f32 %v2751, 1.442695
    %v2753 = vpow.pop %v2752
    %2754 = vadd.xlane.f32.xlu0 %v2753
    %v2755 = vpop.xlane.xlu0 %2754
    %v2756 = vrcp.pop %v2755
    %v2757 = vmul.f32 %v2755, %v2756
    %v2758 = vsub.f32 1.0, %v2757
    %v2759 = vmul.f32 %v2756, %v2758
    %v2760 = vadd.f32 %v2756, %v2759
    %vm2761 = vweird.f32 %v2755
    %vm2762 = vweird.f32 %v2756
    %vm2763 = vmor %vm2761, %vm2762
    %v2764 = vsel %vm2763, %v2756, %v2760
    %v2765 = vand.u32 2147483647, %v2755
    %vm2766 = vcmp.eq.f32.partialorder %v2765, 8.507059e+37
    %v2767 = vand.u32 %v2755, 2147483648
    %v2768 = vor.u32 1.1754944e-38, %v2767
    %v2769 = vsel %vm2766, %v2768, %v2764
    %v2770 = vmul.f32 %v2753, %v2769
    %2771 = vst [vmem:[#allocation11] sm:$0xff] %v2770
    // Predicated region
    $region50: #{tpu_custom_call.1} parent=1 // pred_check
      _
    $region51: #{tpu_custom_call.1} parent=1 // pred_check_branch
      %2773 = sbr.rel (0) target = $region53
    $region52: #{tpu_custom_call.1} parent=1 // pred_region
      %2775 = vsyncadd [#allocation4], 0
      %s2777 = sshll.u32 [#allocation11], 4
      %s2778 = int_to_ptr.vmem [resolvable:$true] %s2777
      %s2779 = sshll.u32 %s7, 4
      %s2780 = int_to_ptr.hbm [resolvable:$true] %s2779
      %2782 = dma.vmem_to_hbm [thread:$0]  %s2778, 128, %s2780, [#allocation4]
    $region53: #{tpu_custom_call.1} parent=1 // pred_fallthru
      _
    // Predicated region
    $region54: #{tpu_custom_call.1} parent=1 // pred_check
      _
    $region55: #{tpu_custom_call.1} parent=1 // pred_check_branch
      %2784 = sbr.rel (0) target = $region57
    $region56: #{tpu_custom_call.1} parent=1 // pred_region
      %2786 = dma.done [#allocation4], 128
    $region57: #{tpu_custom_call.1} parent=1 // pred_fallthru
      _
    %2787 = vsyncpa [#allocation3], 1
    %2788 = vsyncpa [#allocation6], 1
    %2789 = vsyncpa [#allocation9], 1
    %2790 = vsyncpa [#allocation4], 1

</llo_original>
